<compile_context>
chip_gen: v7x
topology: tpu7x:2x2x1
jax: 0.10.0
libtpu: 0.0.40
codegen_flags: <defaults>
</compile_context>

<pallas_src>
import functools

import jax
import jax.numpy as jnp
from jax import lax
from jax.experimental import pallas as pl
from jax.experimental.pallas import tpu as pltpu


def _lstm_block_kernel(x_ref, hx0_ref, cx0_ref, w_ref,   # inputs
                       hy_ref, cy_ref,                    # outputs
                       hx_sc, cx_sc,                      # scratch (f32 carries)
                       *, ts, hidden):
    """Processes `ts` consecutive time steps per grid iteration (grid axis = time blocks)."""
    tb = pl.program_id(0)

    @pl.when(tb == 0)
    def _init():
        hx_sc[...] = hx0_ref[...].astype(jnp.float32)
        cx_sc[...] = cx0_ref[...].astype(jnp.float32)

    H = hidden
    w = w_ref[...]          # [H, 4H] bf16, gate order i|f|o|g, VMEM-resident (constant block)

    def step(s, carry):
        hx = hx_sc[...]
        cx = cx_sc[...]
        # Plain contraction hx [B,H] @ W [H,4H]: bf16 MXU operands, f32 accumulation,
        # no in-loop transpose.
        hid2hid = jnp.dot(hx.astype(jnp.bfloat16), w,
                          preferred_element_type=jnp.float32)
        gates = x_ref[s].astype(jnp.float32) + hid2hid    # [B, 4H], order i|f|o|g

        sig = jax.nn.sigmoid(gates[:, :3 * H])            # one contiguous sigmoid slab (i,f,o)
        g = jnp.tanh(gates[:, 3 * H:])                    # one contiguous tanh slab
        i = sig[:, 0 * H:1 * H]
        f = sig[:, 1 * H:2 * H]
        o = sig[:, 2 * H:3 * H]

        cy = f * cx + i * g
        hy = o * jnp.tanh(cy)

        # Carry state to the next step / grid block, emit this step's outputs.
        hx_sc[...] = hy
        cx_sc[...] = cy
        hy_ref[s] = hy.astype(hy_ref.dtype)
        cy_ref[s] = cy.astype(cy_ref.dtype)
        return carry

    lax.fori_loop(0, ts, step, 0, unroll=True)


@functools.partial(jax.jit, static_argnames=("ts",))
def lstm_sequence_forward(in2hid_seq, hx0, cx0, w_hh, *, ts=8):
    """Apply LSTMCell.forward(pre_cal=True) over T steps inside one kernel.

    Args:
      in2hid_seq: [T, B, 4H] precomputed input projections (PyTorch gate order i|f|g|o).
      hx0, cx0:   [B, H] initial hidden / cell state.
      w_hh:       [4H, H] hidden_weights.weight in PyTorch nn.Linear layout.
      ts:         time steps processed per grid iteration.
    Returns:
      (hy_seq, cy_seq): each [T, B, H].
    """
    T, B, G = in2hid_seq.shape
    H = hx0.shape[1]
    assert G == 4 * H

    ts = min(ts, T)
    n_blocks = pl.cdiv(T, ts)
    T_pad = n_blocks * ts

    # Gate reorder i|f|g|o -> i|f|o|g (contiguous sigmoid slab + tanh slab in the kernel),
    # applied consistently to the weight rows and the in2hid channels.
    def _reorder_gates(a, axis):
        i_f = lax.slice_in_dim(a, 0, 2 * H, axis=axis)
        g = lax.slice_in_dim(a, 2 * H, 3 * H, axis=axis)
        o = lax.slice_in_dim(a, 3 * H, 4 * H, axis=axis)
        return jnp.concatenate([i_f, o, g], axis=axis)

    # One-time weight prep: permute gates, transpose to [H, 4H], bf16 MXU operand.
    w_t = jnp.transpose(_reorder_gates(w_hh, axis=0)).astype(jnp.bfloat16)   # [H, 4H]

    # Stream the per-step input projection in bf16 (halves HBM traffic); gate math stays f32.
    x = _reorder_gates(in2hid_seq, axis=2).astype(jnp.bfloat16)
    if T_pad != T:
        x = jnp.pad(x, ((0, T_pad - T), (0, 0), (0, 0)))

    kernel = functools.partial(_lstm_block_kernel, ts=ts, hidden=H)

    grid_spec = pltpu.PrefetchScalarGridSpec(
        num_scalar_prefetch=0,
        grid=(n_blocks,),
        in_specs=[
            # Time-blocked stream of precomputed input projections.
            pl.BlockSpec((ts, B, 4 * H), lambda tb: (tb, 0, 0)),
            # Initial states: constant block index -> DMA'd once, resident.
            pl.BlockSpec((B, H), lambda tb: (0, 0)),
            pl.BlockSpec((B, H), lambda tb: (0, 0)),
            # Weight: constant block index -> fetched once, kept resident in VMEM;
            # prologue DMA overlaps the first input fetch (no blocking sync_copy).
            pl.BlockSpec((H, 4 * H), lambda tb: (0, 0)),
        ],
        out_specs=[
            pl.BlockSpec((ts, B, H), lambda tb: (tb, 0, 0)),
            pl.BlockSpec((ts, B, H), lambda tb: (tb, 0, 0)),
        ],
        scratch_shapes=[
            pltpu.VMEM((B, H), jnp.float32),   # hx carry (persists across grid steps)
            pltpu.VMEM((B, H), jnp.float32),   # cx carry
        ],
    )

    hy_seq, cy_seq = pl.pallas_call(
        kernel,
        out_shape=(
            jax.ShapeDtypeStruct((T_pad, B, H), hx0.dtype),
            jax.ShapeDtypeStruct((T_pad, B, H), cx0.dtype),
        ),
        grid_spec=grid_spec,
        compiler_params=pltpu.CompilerParams(
            dimension_semantics=("arbitrary",),        # recurrence over time -> sequential
            vmem_limit_bytes=32 * 1024 * 1024,         # explicit budget, safe on v5e/v6e/v7x
        ),
    )(x, hx0, cx0, w_t)
    return hy_seq[:T], cy_seq[:T]


def lstm_cell_forward(in2hid, hx, cx, w_hh):
    """Single-step interface matching the original LSTMCell.forward (pre_cal=True)."""
    hy_seq, cy_seq = lstm_sequence_forward(in2hid[None], hx, cx, w_hh, ts=1)
    return hy_seq[0], cy_seq[0]


def _reference_scan(in2hid_seq, hx0, cx0, w_hh, matmul_dtype, round_inputs=False):
    """Pure-JAX reference in the original i|f|g|o layout.

    matmul_dtype / round_inputs let us mirror the kernel's bf16 MXU operands and
    bf16 input stream for a tight-tolerance comparison.
    """
    x_seq = in2hid_seq
    if round_inputs:
        x_seq = x_seq.astype(jnp.bfloat16).astype(jnp.float32)

    def step(carry, x):
        hx, cx = carry
        hid2hid = lax.dot_general(
            hx.astype(matmul_dtype), w_hh.astype(matmul_dtype),
            dimension_numbers=(((1,), (1,)), ((), ())),
            preferred_element_type=jnp.float32,
        )
        gates = x + hid2hid
        i, f, g, o = jnp.split(gates, 4, axis=1)
        i = jax.nn.sigmoid(i)
        f = jax.nn.sigmoid(f)
        g = jnp.tanh(g)
        o = jax.nn.sigmoid(o)
        cy = f * cx + i * g
        hy = o * jnp.tanh(cy)
        return (hy, cy), (hy, cy)

    (_, _), (hy_seq, cy_seq) = lax.scan(step, (hx0, cx0), x_seq)
    return hy_seq, cy_seq


if __name__ == "__main__":
    B = 8     # batch (sublane quantum for f32)
    H = 128   # hidden_size (multiple of 128 keeps gate slices lane-aligned)
    T = 16    # fused sequence length
    TS = 8    # time steps per grid iteration

    key = jax.random.PRNGKey(0)
    k_in, k_hx, k_cx, k_w = jax.random.split(key, 4)

    # Parameter init matching reset_params(): uniform(-sqrt(1/H), sqrt(1/H)),
    # hidden_weights.weight shape [4H, H].
    bound = (1.0 / H) ** 0.5
    w_hh = jax.random.uniform(k_w, (4 * H, H), jnp.float32, -bound, bound)
    # TODO(synk): input_weights (nn.Linear(1,1,False)) is unused in the
    # pre_cal=True path and the pre_cal=False branch references undefined names
    # (not executable in the original module), so neither is materialized here.

    in2hid_seq = jax.random.normal(k_in, (T, B, 4 * H), jnp.float32)
    hx0 = jax.random.normal(k_hx, (B, H), jnp.float32)
    cx0 = jax.random.normal(k_cx, (B, H), jnp.float32)

    hy_seq, cy_seq = lstm_sequence_forward(in2hid_seq, hx0, cx0, w_hh, ts=TS)
    jax.block_until_ready((hy_seq, cy_seq))

    # 1) Check against a reference that mirrors the kernel's bf16 MXU operands
    #    and bf16 input stream (tight tolerance).
    hy_bf, cy_bf = _reference_scan(in2hid_seq, hx0, cx0, w_hh,
                                   jnp.bfloat16, round_inputs=True)
    assert jnp.allclose(hy_seq, hy_bf, atol=5e-3, rtol=5e-3)
    assert jnp.allclose(cy_seq, cy_bf, atol=5e-3, rtol=5e-3)

    # 2) Sanity check against the exact f32 module semantics (tolerance loosened
    #    for the bf16 matmul operands; would need to grow with much larger T).
    hy_f32, cy_f32 = _reference_scan(in2hid_seq, hx0, cx0, w_hh, jnp.float32)
    assert jnp.allclose(hy_seq, hy_f32, atol=5e-2, rtol=5e-2)
    assert jnp.allclose(cy_seq, cy_f32, atol=5e-2, rtol=5e-2)

    # 3) Single-step interface (original LSTMCell.forward, pre_cal=True).
    hy1, cy1 = lstm_cell_forward(in2hid_seq[0], hx0, cx0, w_hh)
    jax.block_until_ready((hy1, cy1))
    assert jnp.allclose(hy1, hy_f32[0], atol=5e-2, rtol=5e-2)
    assert jnp.allclose(cy1, cy_f32[0], atol=5e-2, rtol=5e-2)

    print("KERNEL_OK")
</pallas_src>

<mosaic_0001>
module attributes {stable_mosaic.version = 11 : i64} {
  func.func @_lstm_block_kernel(%arg0: i32, %arg1: memref<8x8x512xbf16, #tpu.memory_space<vmem>>, %arg2: memref<8x128xf32, #tpu.memory_space<vmem>>, %arg3: memref<8x128xf32, #tpu.memory_space<vmem>>, %arg4: memref<128x512xbf16, #tpu.memory_space<vmem>>, %arg5: memref<8x8x128xf32, #tpu.memory_space<vmem>>, %arg6: memref<8x8x128xf32, #tpu.memory_space<vmem>>, %arg7: memref<8x128xf32, #tpu.memory_space<vmem>>, %arg8: memref<8x128xf32, #tpu.memory_space<vmem>>) attributes {dimension_semantics = [#tpu.dimension_semantics<arbitrary>], iteration_bounds = array<i64: 2>, scalar_prefetch = 0 : i64, scratch_operands = 2 : i64, tpu.core_type = #tpu.core_type<tc>, window_params = [{transform_indices = @transform_0, window_bounds = array<i64: 8, 8, 512>}, {pipeline_mode = #tpu.pipeline_mode<synchronous>, transform_indices = @transform_1, window_bounds = array<i64: 8, 128>}, {pipeline_mode = #tpu.pipeline_mode<synchronous>, transform_indices = @transform_2, window_bounds = array<i64: 8, 128>}, {pipeline_mode = #tpu.pipeline_mode<synchronous>, transform_indices = @transform_3, window_bounds = array<i64: 128, 512>}, {transform_indices = @transform_4, window_bounds = array<i64: 8, 8, 128>}, {transform_indices = @transform_5, window_bounds = array<i64: 8, 8, 128>}]} {
    %c0_i32 = arith.constant 0 : i32
    %0 = arith.cmpi eq, %arg0, %c0_i32 : i32
    %1 = arith.extui %0 : i1 to i32
    %c0_i32_0 = arith.constant 0 : i32
    %2 = arith.cmpi ne, %1, %c0_i32_0 : i32
    scf.if %2 {
      %c0_130 = arith.constant 0 : index
      %c0_131 = arith.constant 0 : index
      %284 = vector.load %arg2[%c0_130, %c0_131] : memref<8x128xf32, #tpu.memory_space<vmem>>, vector<8x128xf32>
      %c0_132 = arith.constant 0 : index
      %c0_133 = arith.constant 0 : index
      %285 = vector.load %arg7[%c0_132, %c0_133] : memref<8x128xf32, #tpu.memory_space<vmem>>, vector<8x128xf32>
      tpu.vector_store %arg7[%c0_132, %c0_133], %284 {strides = array<i32>} : memref<8x128xf32, #tpu.memory_space<vmem>>, vector<8x128xf32>,
      %c0_134 = arith.constant 0 : index
      %c0_135 = arith.constant 0 : index
      %286 = vector.load %arg3[%c0_134, %c0_135] : memref<8x128xf32, #tpu.memory_space<vmem>>, vector<8x128xf32>
      %c0_136 = arith.constant 0 : index
      %c0_137 = arith.constant 0 : index
      %287 = vector.load %arg8[%c0_136, %c0_137] : memref<8x128xf32, #tpu.memory_space<vmem>>, vector<8x128xf32>
      tpu.vector_store %arg8[%c0_136, %c0_137], %286 {strides = array<i32>} : memref<8x128xf32, #tpu.memory_space<vmem>>, vector<8x128xf32>,
    } else {
    }
    %c0 = arith.constant 0 : index
    %c0_1 = arith.constant 0 : index
    %3 = vector.load %arg4[%c0, %c0_1] : memref<128x512xbf16, #tpu.memory_space<vmem>>, vector<128x512xbf16>
    %c0_i32_2 = arith.constant 0 : i32
    %c0_3 = arith.constant 0 : index
    %c0_4 = arith.constant 0 : index
    %4 = vector.load %arg7[%c0_3, %c0_4] : memref<8x128xf32, #tpu.memory_space<vmem>>, vector<8x128xf32>
    %c0_5 = arith.constant 0 : index
    %c0_6 = arith.constant 0 : index
    %5 = vector.load %arg8[%c0_5, %c0_6] : memref<8x128xf32, #tpu.memory_space<vmem>>, vector<8x128xf32>
    %6 = arith.truncf %4 : vector<8x128xf32> to vector<8x128xbf16>
    %cst = arith.constant dense<0.000000e+00> : vector<8x512xf32>
    %7 = tpu.matmul %6, %3, %cst {dimension_numbers = #tpu.dot_dimension_numbers<[1], [0], [0], [1], [0, 0, 1, 1], [], []>} : vector<8x128xbf16>, vector<128x512xbf16>, vector<8x512xf32> -> vector<8x512xf32>
    %8 = arith.index_cast %c0_i32_2 : i32 to index
    %c0_7 = arith.constant 0 : index
    %c0_8 = arith.constant 0 : index
    %9 = vector.load %arg1[%8, %c0_7, %c0_8] : memref<8x8x512xbf16, #tpu.memory_space<vmem>>, vector<1x8x512xbf16>
    %10 = vector.shape_cast %9 : vector<1x8x512xbf16> to vector<8x512xbf16>
    %11 = arith.extf %10 : vector<8x512xbf16> to vector<8x512xf32>
    %12 = arith.addf %11, %7 : vector<8x512xf32>
    %13 = vector.extract_strided_slice %12 {offsets = [0, 0], sizes = [8, 384], strides = [1, 1]} : vector<8x512xf32> to vector<8x384xf32>
    %14 = arith.negf %13 : vector<8x384xf32>
    %15 = math.exp %14 : vector<8x384xf32>
    %cst_9 = arith.constant 1.000000e+00 : f32
    %16 = vector.broadcast %cst_9 : f32 to vector<8x384xf32>
    %17 = arith.addf %16, %15 : vector<8x384xf32>
    %18 = arith.divf %16, %17 : vector<8x384xf32>
    %19 = vector.extract_strided_slice %12 {offsets = [0, 384], sizes = [8, 128], strides = [1, 1]} : vector<8x512xf32> to vector<8x128xf32>
    %20 = math.tanh %19 : vector<8x128xf32>
    %21 = vector.extract_strided_slice %18 {offsets = [0, 0], sizes = [8, 128], strides = [1, 1]} : vector<8x384xf32> to vector<8x128xf32>
    %22 = vector.extract_strided_slice %18 {offsets = [0, 128], sizes = [8, 128], strides = [1, 1]} : vector<8x384xf32> to vector<8x128xf32>
    %23 = vector.extract_strided_slice %18 {offsets = [0, 256], sizes = [8, 128], strides = [1, 1]} : vector<8x384xf32> to vector<8x128xf32>
    %24 = arith.mulf %22, %5 : vector<8x128xf32>
    %25 = arith.mulf %21, %20 : vector<8x128xf32>
    %26 = arith.addf %24, %25 : vector<8x128xf32>
    %27 = math.tanh %26 : vector<8x128xf32>
    %28 = arith.mulf %23, %27 : vector<8x128xf32>
    %c0_10 = arith.constant 0 : index
    %c0_11 = arith.constant 0 : index
    %29 = vector.load %arg7[%c0_10, %c0_11] : memref<8x128xf32, #tpu.memory_space<vmem>>, vector<8x128xf32>
    tpu.vector_store %arg7[%c0_10, %c0_11], %28 {strides = array<i32>} : memref<8x128xf32, #tpu.memory_space<vmem>>, vector<8x128xf32>,
    %c0_12 = arith.constant 0 : index
    %c0_13 = arith.constant 0 : index
    %30 = vector.load %arg8[%c0_12, %c0_13] : memref<8x128xf32, #tpu.memory_space<vmem>>, vector<8x128xf32>
    tpu.vector_store %arg8[%c0_12, %c0_13], %26 {strides = array<i32>} : memref<8x128xf32, #tpu.memory_space<vmem>>, vector<8x128xf32>,
    %31 = arith.index_cast %c0_i32_2 : i32 to index
    %c0_14 = arith.constant 0 : index
    %c0_15 = arith.constant 0 : index
    %32 = vector.load %arg5[%31, %c0_14, %c0_15] : memref<8x8x128xf32, #tpu.memory_space<vmem>>, vector<1x8x128xf32>
    %33 = vector.shape_cast %32 : vector<1x8x128xf32> to vector<8x128xf32>
    %34 = vector.shape_cast %28 : vector<8x128xf32> to vector<1x8x128xf32>
    tpu.vector_store %arg5[%31, %c0_14, %c0_15], %34 {strides = array<i32>} : memref<8x8x128xf32, #tpu.memory_space<vmem>>, vector<1x8x128xf32>,
    %35 = arith.index_cast %c0_i32_2 : i32 to index
    %c0_16 = arith.constant 0 : index
    %c0_17 = arith.constant 0 : index
    %36 = vector.load %arg6[%35, %c0_16, %c0_17] : memref<8x8x128xf32, #tpu.memory_space<vmem>>, vector<1x8x128xf32>
    %37 = vector.shape_cast %36 : vector<1x8x128xf32> to vector<8x128xf32>
    %38 = vector.shape_cast %26 : vector<8x128xf32> to vector<1x8x128xf32>
    tpu.vector_store %arg6[%35, %c0_16, %c0_17], %38 {strides = array<i32>} : memref<8x8x128xf32, #tpu.memory_space<vmem>>, vector<1x8x128xf32>,
    %c1_i32 = arith.constant 1 : i32
    %c0_18 = arith.constant 0 : index
    %c0_19 = arith.constant 0 : index
    %39 = vector.load %arg7[%c0_18, %c0_19] : memref<8x128xf32, #tpu.memory_space<vmem>>, vector<8x128xf32>
    %c0_20 = arith.constant 0 : index
    %c0_21 = arith.constant 0 : index
    %40 = vector.load %arg8[%c0_20, %c0_21] : memref<8x128xf32, #tpu.memory_space<vmem>>, vector<8x128xf32>
    %41 = arith.truncf %39 : vector<8x128xf32> to vector<8x128xbf16>
    %cst_22 = arith.constant dense<0.000000e+00> : vector<8x512xf32>
    %42 = tpu.matmul %41, %3, %cst_22 {dimension_numbers = #tpu.dot_dimension_numbers<[1], [0], [0], [1], [0, 0, 1, 1], [], []>} : vector<8x128xbf16>, vector<128x512xbf16>, vector<8x512xf32> -> vector<8x512xf32>
    %43 = arith.index_cast %c1_i32 : i32 to index
    %c0_23 = arith.constant 0 : index
    %c0_24 = arith.constant 0 : index
    %44 = vector.load %arg1[%43, %c0_23, %c0_24] : memref<8x8x512xbf16, #tpu.memory_space<vmem>>, vector<1x8x512xbf16>
    %45 = vector.shape_cast %44 : vector<1x8x512xbf16> to vector<8x512xbf16>
    %46 = arith.extf %45 : vector<8x512xbf16> to vector<8x512xf32>
    %47 = arith.addf %46, %42 : vector<8x512xf32>
    %48 = vector.extract_strided_slice %47 {offsets = [0, 0], sizes = [8, 384], strides = [1, 1]} : vector<8x512xf32> to vector<8x384xf32>
    %49 = arith.negf %48 : vector<8x384xf32>
    %50 = math.exp %49 : vector<8x384xf32>
    %cst_25 = arith.constant 1.000000e+00 : f32
    %51 = vector.broadcast %cst_25 : f32 to vector<8x384xf32>
    %52 = arith.addf %51, %50 : vector<8x384xf32>
    %53 = arith.divf %51, %52 : vector<8x384xf32>
    %54 = vector.extract_strided_slice %47 {offsets = [0, 384], sizes = [8, 128], strides = [1, 1]} : vector<8x512xf32> to vector<8x128xf32>
    %55 = math.tanh %54 : vector<8x128xf32>
    %56 = vector.extract_strided_slice %53 {offsets = [0, 0], sizes = [8, 128], strides = [1, 1]} : vector<8x384xf32> to vector<8x128xf32>
    %57 = vector.extract_strided_slice %53 {offsets = [0, 128], sizes = [8, 128], strides = [1, 1]} : vector<8x384xf32> to vector<8x128xf32>
    %58 = vector.extract_strided_slice %53 {offsets = [0, 256], sizes = [8, 128], strides = [1, 1]} : vector<8x384xf32> to vector<8x128xf32>
    %59 = arith.mulf %57, %40 : vector<8x128xf32>
    %60 = arith.mulf %56, %55 : vector<8x128xf32>
    %61 = arith.addf %59, %60 : vector<8x128xf32>
    %62 = math.tanh %61 : vector<8x128xf32>
    %63 = arith.mulf %58, %62 : vector<8x128xf32>
    %c0_26 = arith.constant 0 : index
    %c0_27 = arith.constant 0 : index
    %64 = vector.load %arg7[%c0_26, %c0_27] : memref<8x128xf32, #tpu.memory_space<vmem>>, vector<8x128xf32>
    tpu.vector_store %arg7[%c0_26, %c0_27], %63 {strides = array<i32>} : memref<8x128xf32, #tpu.memory_space<vmem>>, vector<8x128xf32>,
    %c0_28 = arith.constant 0 : index
    %c0_29 = arith.constant 0 : index
    %65 = vector.load %arg8[%c0_28, %c0_29] : memref<8x128xf32, #tpu.memory_space<vmem>>, vector<8x128xf32>
    tpu.vector_store %arg8[%c0_28, %c0_29], %61 {strides = array<i32>} : memref<8x128xf32, #tpu.memory_space<vmem>>, vector<8x128xf32>,
    %66 = arith.index_cast %c1_i32 : i32 to index
    %c0_30 = arith.constant 0 : index
    %c0_31 = arith.constant 0 : index
    %67 = vector.load %arg5[%66, %c0_30, %c0_31] : memref<8x8x128xf32, #tpu.memory_space<vmem>>, vector<1x8x128xf32>
    %68 = vector.shape_cast %67 : vector<1x8x128xf32> to vector<8x128xf32>
    %69 = vector.shape_cast %63 : vector<8x128xf32> to vector<1x8x128xf32>
    tpu.vector_store %arg5[%66, %c0_30, %c0_31], %69 {strides = array<i32>} : memref<8x8x128xf32, #tpu.memory_space<vmem>>, vector<1x8x128xf32>,
    %70 = arith.index_cast %c1_i32 : i32 to index
    %c0_32 = arith.constant 0 : index
    %c0_33 = arith.constant 0 : index
    %71 = vector.load %arg6[%70, %c0_32, %c0_33] : memref<8x8x128xf32, #tpu.memory_space<vmem>>, vector<1x8x128xf32>
    %72 = vector.shape_cast %71 : vector<1x8x128xf32> to vector<8x128xf32>
    %73 = vector.shape_cast %61 : vector<8x128xf32> to vector<1x8x128xf32>
    tpu.vector_store %arg6[%70, %c0_32, %c0_33], %73 {strides = array<i32>} : memref<8x8x128xf32, #tpu.memory_space<vmem>>, vector<1x8x128xf32>,
    %c2_i32 = arith.constant 2 : i32
    %c0_34 = arith.constant 0 : index
    %c0_35 = arith.constant 0 : index
    %74 = vector.load %arg7[%c0_34, %c0_35] : memref<8x128xf32, #tpu.memory_space<vmem>>, vector<8x128xf32>
    %c0_36 = arith.constant 0 : index
    %c0_37 = arith.constant 0 : index
    %75 = vector.load %arg8[%c0_36, %c0_37] : memref<8x128xf32, #tpu.memory_space<vmem>>, vector<8x128xf32>
    %76 = arith.truncf %74 : vector<8x128xf32> to vector<8x128xbf16>
    %cst_38 = arith.constant dense<0.000000e+00> : vector<8x512xf32>
    %77 = tpu.matmul %76, %3, %cst_38 {dimension_numbers = #tpu.dot_dimension_numbers<[1], [0], [0], [1], [0, 0, 1, 1], [], []>} : vector<8x128xbf16>, vector<128x512xbf16>, vector<8x512xf32> -> vector<8x512xf32>
    %78 = arith.index_cast %c2_i32 : i32 to index
    %c0_39 = arith.constant 0 : index
    %c0_40 = arith.constant 0 : index
    %79 = vector.load %arg1[%78, %c0_39, %c0_40] : memref<8x8x512xbf16, #tpu.memory_space<vmem>>, vector<1x8x512xbf16>
    %80 = vector.shape_cast %79 : vector<1x8x512xbf16> to vector<8x512xbf16>
    %81 = arith.extf %80 : vector<8x512xbf16> to vector<8x512xf32>
    %82 = arith.addf %81, %77 : vector<8x512xf32>
    %83 = vector.extract_strided_slice %82 {offsets = [0, 0], sizes = [8, 384], strides = [1, 1]} : vector<8x512xf32> to vector<8x384xf32>
    %84 = arith.negf %83 : vector<8x384xf32>
    %85 = math.exp %84 : vector<8x384xf32>
    %cst_41 = arith.constant 1.000000e+00 : f32
    %86 = vector.broadcast %cst_41 : f32 to vector<8x384xf32>
    %87 = arith.addf %86, %85 : vector<8x384xf32>
    %88 = arith.divf %86, %87 : vector<8x384xf32>
    %89 = vector.extract_strided_slice %82 {offsets = [0, 384], sizes = [8, 128], strides = [1, 1]} : vector<8x512xf32> to vector<8x128xf32>
    %90 = math.tanh %89 : vector<8x128xf32>
    %91 = vector.extract_strided_slice %88 {offsets = [0, 0], sizes = [8, 128], strides = [1, 1]} : vector<8x384xf32> to vector<8x128xf32>
    %92 = vector.extract_strided_slice %88 {offsets = [0, 128], sizes = [8, 128], strides = [1, 1]} : vector<8x384xf32> to vector<8x128xf32>
    %93 = vector.extract_strided_slice %88 {offsets = [0, 256], sizes = [8, 128], strides = [1, 1]} : vector<8x384xf32> to vector<8x128xf32>
    %94 = arith.mulf %92, %75 : vector<8x128xf32>
    %95 = arith.mulf %91, %90 : vector<8x128xf32>
    %96 = arith.addf %94, %95 : vector<8x128xf32>
    %97 = math.tanh %96 : vector<8x128xf32>
    %98 = arith.mulf %93, %97 : vector<8x128xf32>
    %c0_42 = arith.constant 0 : index
    %c0_43 = arith.constant 0 : index
    %99 = vector.load %arg7[%c0_42, %c0_43] : memref<8x128xf32, #tpu.memory_space<vmem>>, vector<8x128xf32>
    tpu.vector_store %arg7[%c0_42, %c0_43], %98 {strides = array<i32>} : memref<8x128xf32, #tpu.memory_space<vmem>>, vector<8x128xf32>,
    %c0_44 = arith.constant 0 : index
    %c0_45 = arith.constant 0 : index
    %100 = vector.load %arg8[%c0_44, %c0_45] : memref<8x128xf32, #tpu.memory_space<vmem>>, vector<8x128xf32>
    tpu.vector_store %arg8[%c0_44, %c0_45], %96 {strides = array<i32>} : memref<8x128xf32, #tpu.memory_space<vmem>>, vector<8x128xf32>,
    %101 = arith.index_cast %c2_i32 : i32 to index
    %c0_46 = arith.constant 0 : index
    %c0_47 = arith.constant 0 : index
    %102 = vector.load %arg5[%101, %c0_46, %c0_47] : memref<8x8x128xf32, #tpu.memory_space<vmem>>, vector<1x8x128xf32>
    %103 = vector.shape_cast %102 : vector<1x8x128xf32> to vector<8x128xf32>
    %104 = vector.shape_cast %98 : vector<8x128xf32> to vector<1x8x128xf32>
    tpu.vector_store %arg5[%101, %c0_46, %c0_47], %104 {strides = array<i32>} : memref<8x8x128xf32, #tpu.memory_space<vmem>>, vector<1x8x128xf32>,
    %105 = arith.index_cast %c2_i32 : i32 to index
    %c0_48 = arith.constant 0 : index
    %c0_49 = arith.constant 0 : index
    %106 = vector.load %arg6[%105, %c0_48, %c0_49] : memref<8x8x128xf32, #tpu.memory_space<vmem>>, vector<1x8x128xf32>
    %107 = vector.shape_cast %106 : vector<1x8x128xf32> to vector<8x128xf32>
    %108 = vector.shape_cast %96 : vector<8x128xf32> to vector<1x8x128xf32>
    tpu.vector_store %arg6[%105, %c0_48, %c0_49], %108 {strides = array<i32>} : memref<8x8x128xf32, #tpu.memory_space<vmem>>, vector<1x8x128xf32>,
    %c3_i32 = arith.constant 3 : i32
    %c0_50 = arith.constant 0 : index
    %c0_51 = arith.constant 0 : index
    %109 = vector.load %arg7[%c0_50, %c0_51] : memref<8x128xf32, #tpu.memory_space<vmem>>, vector<8x128xf32>
    %c0_52 = arith.constant 0 : index
    %c0_53 = arith.constant 0 : index
    %110 = vector.load %arg8[%c0_52, %c0_53] : memref<8x128xf32, #tpu.memory_space<vmem>>, vector<8x128xf32>
    %111 = arith.truncf %109 : vector<8x128xf32> to vector<8x128xbf16>
    %cst_54 = arith.constant dense<0.000000e+00> : vector<8x512xf32>
    %112 = tpu.matmul %111, %3, %cst_54 {dimension_numbers = #tpu.dot_dimension_numbers<[1], [0], [0], [1], [0, 0, 1, 1], [], []>} : vector<8x128xbf16>, vector<128x512xbf16>, vector<8x512xf32> -> vector<8x512xf32>
    %113 = arith.index_cast %c3_i32 : i32 to index
    %c0_55 = arith.constant 0 : index
    %c0_56 = arith.constant 0 : index
    %114 = vector.load %arg1[%113, %c0_55, %c0_56] : memref<8x8x512xbf16, #tpu.memory_space<vmem>>, vector<1x8x512xbf16>
    %115 = vector.shape_cast %114 : vector<1x8x512xbf16> to vector<8x512xbf16>
    %116 = arith.extf %115 : vector<8x512xbf16> to vector<8x512xf32>
    %117 = arith.addf %116, %112 : vector<8x512xf32>
    %118 = vector.extract_strided_slice %117 {offsets = [0, 0], sizes = [8, 384], strides = [1, 1]} : vector<8x512xf32> to vector<8x384xf32>
    %119 = arith.negf %118 : vector<8x384xf32>
    %120 = math.exp %119 : vector<8x384xf32>
    %cst_57 = arith.constant 1.000000e+00 : f32
    %121 = vector.broadcast %cst_57 : f32 to vector<8x384xf32>
    %122 = arith.addf %121, %120 : vector<8x384xf32>
    %123 = arith.divf %121, %122 : vector<8x384xf32>
    %124 = vector.extract_strided_slice %117 {offsets = [0, 384], sizes = [8, 128], strides = [1, 1]} : vector<8x512xf32> to vector<8x128xf32>
    %125 = math.tanh %124 : vector<8x128xf32>
    %126 = vector.extract_strided_slice %123 {offsets = [0, 0], sizes = [8, 128], strides = [1, 1]} : vector<8x384xf32> to vector<8x128xf32>
    %127 = vector.extract_strided_slice %123 {offsets = [0, 128], sizes = [8, 128], strides = [1, 1]} : vector<8x384xf32> to vector<8x128xf32>
    %128 = vector.extract_strided_slice %123 {offsets = [0, 256], sizes = [8, 128], strides = [1, 1]} : vector<8x384xf32> to vector<8x128xf32>
    %129 = arith.mulf %127, %110 : vector<8x128xf32>
    %130 = arith.mulf %126, %125 : vector<8x128xf32>
    %131 = arith.addf %129, %130 : vector<8x128xf32>
    %132 = math.tanh %131 : vector<8x128xf32>
    %133 = arith.mulf %128, %132 : vector<8x128xf32>
    %c0_58 = arith.constant 0 : index
    %c0_59 = arith.constant 0 : index
    %134 = vector.load %arg7[%c0_58, %c0_59] : memref<8x128xf32, #tpu.memory_space<vmem>>, vector<8x128xf32>
    tpu.vector_store %arg7[%c0_58, %c0_59], %133 {strides = array<i32>} : memref<8x128xf32, #tpu.memory_space<vmem>>, vector<8x128xf32>,
    %c0_60 = arith.constant 0 : index
    %c0_61 = arith.constant 0 : index
    %135 = vector.load %arg8[%c0_60, %c0_61] : memref<8x128xf32, #tpu.memory_space<vmem>>, vector<8x128xf32>
    tpu.vector_store %arg8[%c0_60, %c0_61], %131 {strides = array<i32>} : memref<8x128xf32, #tpu.memory_space<vmem>>, vector<8x128xf32>,
    %136 = arith.index_cast %c3_i32 : i32 to index
    %c0_62 = arith.constant 0 : index
    %c0_63 = arith.constant 0 : index
    %137 = vector.load %arg5[%136, %c0_62, %c0_63] : memref<8x8x128xf32, #tpu.memory_space<vmem>>, vector<1x8x128xf32>
    %138 = vector.shape_cast %137 : vector<1x8x128xf32> to vector<8x128xf32>
    %139 = vector.shape_cast %133 : vector<8x128xf32> to vector<1x8x128xf32>
    tpu.vector_store %arg5[%136, %c0_62, %c0_63], %139 {strides = array<i32>} : memref<8x8x128xf32, #tpu.memory_space<vmem>>, vector<1x8x128xf32>,
    %140 = arith.index_cast %c3_i32 : i32 to index
    %c0_64 = arith.constant 0 : index
    %c0_65 = arith.constant 0 : index
    %141 = vector.load %arg6[%140, %c0_64, %c0_65] : memref<8x8x128xf32, #tpu.memory_space<vmem>>, vector<1x8x128xf32>
    %142 = vector.shape_cast %141 : vector<1x8x128xf32> to vector<8x128xf32>
    %143 = vector.shape_cast %131 : vector<8x128xf32> to vector<1x8x128xf32>
    tpu.vector_store %arg6[%140, %c0_64, %c0_65], %143 {strides = array<i32>} : memref<8x8x128xf32, #tpu.memory_space<vmem>>, vector<1x8x128xf32>,
    %c4_i32 = arith.constant 4 : i32
    %c0_66 = arith.constant 0 : index
    %c0_67 = arith.constant 0 : index
    %144 = vector.load %arg7[%c0_66, %c0_67] : memref<8x128xf32, #tpu.memory_space<vmem>>, vector<8x128xf32>
    %c0_68 = arith.constant 0 : index
    %c0_69 = arith.constant 0 : index
    %145 = vector.load %arg8[%c0_68, %c0_69] : memref<8x128xf32, #tpu.memory_space<vmem>>, vector<8x128xf32>
    %146 = arith.truncf %144 : vector<8x128xf32> to vector<8x128xbf16>
    %cst_70 = arith.constant dense<0.000000e+00> : vector<8x512xf32>
    %147 = tpu.matmul %146, %3, %cst_70 {dimension_numbers = #tpu.dot_dimension_numbers<[1], [0], [0], [1], [0, 0, 1, 1], [], []>} : vector<8x128xbf16>, vector<128x512xbf16>, vector<8x512xf32> -> vector<8x512xf32>
    %148 = arith.index_cast %c4_i32 : i32 to index
    %c0_71 = arith.constant 0 : index
    %c0_72 = arith.constant 0 : index
    %149 = vector.load %arg1[%148, %c0_71, %c0_72] : memref<8x8x512xbf16, #tpu.memory_space<vmem>>, vector<1x8x512xbf16>
    %150 = vector.shape_cast %149 : vector<1x8x512xbf16> to vector<8x512xbf16>
    %151 = arith.extf %150 : vector<8x512xbf16> to vector<8x512xf32>
    %152 = arith.addf %151, %147 : vector<8x512xf32>
    %153 = vector.extract_strided_slice %152 {offsets = [0, 0], sizes = [8, 384], strides = [1, 1]} : vector<8x512xf32> to vector<8x384xf32>
    %154 = arith.negf %153 : vector<8x384xf32>
    %155 = math.exp %154 : vector<8x384xf32>
    %cst_73 = arith.constant 1.000000e+00 : f32
    %156 = vector.broadcast %cst_73 : f32 to vector<8x384xf32>
    %157 = arith.addf %156, %155 : vector<8x384xf32>
    %158 = arith.divf %156, %157 : vector<8x384xf32>
    %159 = vector.extract_strided_slice %152 {offsets = [0, 384], sizes = [8, 128], strides = [1, 1]} : vector<8x512xf32> to vector<8x128xf32>
    %160 = math.tanh %159 : vector<8x128xf32>
    %161 = vector.extract_strided_slice %158 {offsets = [0, 0], sizes = [8, 128], strides = [1, 1]} : vector<8x384xf32> to vector<8x128xf32>
    %162 = vector.extract_strided_slice %158 {offsets = [0, 128], sizes = [8, 128], strides = [1, 1]} : vector<8x384xf32> to vector<8x128xf32>
    %163 = vector.extract_strided_slice %158 {offsets = [0, 256], sizes = [8, 128], strides = [1, 1]} : vector<8x384xf32> to vector<8x128xf32>
    %164 = arith.mulf %162, %145 : vector<8x128xf32>
    %165 = arith.mulf %161, %160 : vector<8x128xf32>
    %166 = arith.addf %164, %165 : vector<8x128xf32>
    %167 = math.tanh %166 : vector<8x128xf32>
    %168 = arith.mulf %163, %167 : vector<8x128xf32>
    %c0_74 = arith.constant 0 : index
    %c0_75 = arith.constant 0 : index
    %169 = vector.load %arg7[%c0_74, %c0_75] : memref<8x128xf32, #tpu.memory_space<vmem>>, vector<8x128xf32>
    tpu.vector_store %arg7[%c0_74, %c0_75], %168 {strides = array<i32>} : memref<8x128xf32, #tpu.memory_space<vmem>>, vector<8x128xf32>,
    %c0_76 = arith.constant 0 : index
    %c0_77 = arith.constant 0 : index
    %170 = vector.load %arg8[%c0_76, %c0_77] : memref<8x128xf32, #tpu.memory_space<vmem>>, vector<8x128xf32>
    tpu.vector_store %arg8[%c0_76, %c0_77], %166 {strides = array<i32>} : memref<8x128xf32, #tpu.memory_space<vmem>>, vector<8x128xf32>,
    %171 = arith.index_cast %c4_i32 : i32 to index
    %c0_78 = arith.constant 0 : index
    %c0_79 = arith.constant 0 : index
    %172 = vector.load %arg5[%171, %c0_78, %c0_79] : memref<8x8x128xf32, #tpu.memory_space<vmem>>, vector<1x8x128xf32>
    %173 = vector.shape_cast %172 : vector<1x8x128xf32> to vector<8x128xf32>
    %174 = vector.shape_cast %168 : vector<8x128xf32> to vector<1x8x128xf32>
    tpu.vector_store %arg5[%171, %c0_78, %c0_79], %174 {strides = array<i32>} : memref<8x8x128xf32, #tpu.memory_space<vmem>>, vector<1x8x128xf32>,
    %175 = arith.index_cast %c4_i32 : i32 to index
    %c0_80 = arith.constant 0 : index
    %c0_81 = arith.constant 0 : index
    %176 = vector.load %arg6[%175, %c0_80, %c0_81] : memref<8x8x128xf32, #tpu.memory_space<vmem>>, vector<1x8x128xf32>
    %177 = vector.shape_cast %176 : vector<1x8x128xf32> to vector<8x128xf32>
    %178 = vector.shape_cast %166 : vector<8x128xf32> to vector<1x8x128xf32>
    tpu.vector_store %arg6[%175, %c0_80, %c0_81], %178 {strides = array<i32>} : memref<8x8x128xf32, #tpu.memory_space<vmem>>, vector<1x8x128xf32>,
    %c5_i32 = arith.constant 5 : i32
    %c0_82 = arith.constant 0 : index
    %c0_83 = arith.constant 0 : index
    %179 = vector.load %arg7[%c0_82, %c0_83] : memref<8x128xf32, #tpu.memory_space<vmem>>, vector<8x128xf32>
    %c0_84 = arith.constant 0 : index
    %c0_85 = arith.constant 0 : index
    %180 = vector.load %arg8[%c0_84, %c0_85] : memref<8x128xf32, #tpu.memory_space<vmem>>, vector<8x128xf32>
    %181 = arith.truncf %179 : vector<8x128xf32> to vector<8x128xbf16>
    %cst_86 = arith.constant dense<0.000000e+00> : vector<8x512xf32>
    %182 = tpu.matmul %181, %3, %cst_86 {dimension_numbers = #tpu.dot_dimension_numbers<[1], [0], [0], [1], [0, 0, 1, 1], [], []>} : vector<8x128xbf16>, vector<128x512xbf16>, vector<8x512xf32> -> vector<8x512xf32>
    %183 = arith.index_cast %c5_i32 : i32 to index
    %c0_87 = arith.constant 0 : index
    %c0_88 = arith.constant 0 : index
    %184 = vector.load %arg1[%183, %c0_87, %c0_88] : memref<8x8x512xbf16, #tpu.memory_space<vmem>>, vector<1x8x512xbf16>
    %185 = vector.shape_cast %184 : vector<1x8x512xbf16> to vector<8x512xbf16>
    %186 = arith.extf %185 : vector<8x512xbf16> to vector<8x512xf32>
    %187 = arith.addf %186, %182 : vector<8x512xf32>
    %188 = vector.extract_strided_slice %187 {offsets = [0, 0], sizes = [8, 384], strides = [1, 1]} : vector<8x512xf32> to vector<8x384xf32>
    %189 = arith.negf %188 : vector<8x384xf32>
    %190 = math.exp %189 : vector<8x384xf32>
    %cst_89 = arith.constant 1.000000e+00 : f32
    %191 = vector.broadcast %cst_89 : f32 to vector<8x384xf32>
    %192 = arith.addf %191, %190 : vector<8x384xf32>
    %193 = arith.divf %191, %192 : vector<8x384xf32>
    %194 = vector.extract_strided_slice %187 {offsets = [0, 384], sizes = [8, 128], strides = [1, 1]} : vector<8x512xf32> to vector<8x128xf32>
    %195 = math.tanh %194 : vector<8x128xf32>
    %196 = vector.extract_strided_slice %193 {offsets = [0, 0], sizes = [8, 128], strides = [1, 1]} : vector<8x384xf32> to vector<8x128xf32>
    %197 = vector.extract_strided_slice %193 {offsets = [0, 128], sizes = [8, 128], strides = [1, 1]} : vector<8x384xf32> to vector<8x128xf32>
    %198 = vector.extract_strided_slice %193 {offsets = [0, 256], sizes = [8, 128], strides = [1, 1]} : vector<8x384xf32> to vector<8x128xf32>
    %199 = arith.mulf %197, %180 : vector<8x128xf32>
    %200 = arith.mulf %196, %195 : vector<8x128xf32>
    %201 = arith.addf %199, %200 : vector<8x128xf32>
    %202 = math.tanh %201 : vector<8x128xf32>
    %203 = arith.mulf %198, %202 : vector<8x128xf32>
    %c0_90 = arith.constant 0 : index
    %c0_91 = arith.constant 0 : index
    %204 = vector.load %arg7[%c0_90, %c0_91] : memref<8x128xf32, #tpu.memory_space<vmem>>, vector<8x128xf32>
    tpu.vector_store %arg7[%c0_90, %c0_91], %203 {strides = array<i32>} : memref<8x128xf32, #tpu.memory_space<vmem>>, vector<8x128xf32>,
    %c0_92 = arith.constant 0 : index
    %c0_93 = arith.constant 0 : index
    %205 = vector.load %arg8[%c0_92, %c0_93] : memref<8x128xf32, #tpu.memory_space<vmem>>, vector<8x128xf32>
    tpu.vector_store %arg8[%c0_92, %c0_93], %201 {strides = array<i32>} : memref<8x128xf32, #tpu.memory_space<vmem>>, vector<8x128xf32>,
    %206 = arith.index_cast %c5_i32 : i32 to index
    %c0_94 = arith.constant 0 : index
    %c0_95 = arith.constant 0 : index
    %207 = vector.load %arg5[%206, %c0_94, %c0_95] : memref<8x8x128xf32, #tpu.memory_space<vmem>>, vector<1x8x128xf32>
    %208 = vector.shape_cast %207 : vector<1x8x128xf32> to vector<8x128xf32>
    %209 = vector.shape_cast %203 : vector<8x128xf32> to vector<1x8x128xf32>
    tpu.vector_store %arg5[%206, %c0_94, %c0_95], %209 {strides = array<i32>} : memref<8x8x128xf32, #tpu.memory_space<vmem>>, vector<1x8x128xf32>,
    %210 = arith.index_cast %c5_i32 : i32 to index
    %c0_96 = arith.constant 0 : index
    %c0_97 = arith.constant 0 : index
    %211 = vector.load %arg6[%210, %c0_96, %c0_97] : memref<8x8x128xf32, #tpu.memory_space<vmem>>, vector<1x8x128xf32>
    %212 = vector.shape_cast %211 : vector<1x8x128xf32> to vector<8x128xf32>
    %213 = vector.shape_cast %201 : vector<8x128xf32> to vector<1x8x128xf32>
    tpu.vector_store %arg6[%210, %c0_96, %c0_97], %213 {strides = array<i32>} : memref<8x8x128xf32, #tpu.memory_space<vmem>>, vector<1x8x128xf32>,
    %c6_i32 = arith.constant 6 : i32
    %c0_98 = arith.constant 0 : index
    %c0_99 = arith.constant 0 : index
    %214 = vector.load %arg7[%c0_98, %c0_99] : memref<8x128xf32, #tpu.memory_space<vmem>>, vector<8x128xf32>
    %c0_100 = arith.constant 0 : index
    %c0_101 = arith.constant 0 : index
    %215 = vector.load %arg8[%c0_100, %c0_101] : memref<8x128xf32, #tpu.memory_space<vmem>>, vector<8x128xf32>
    %216 = arith.truncf %214 : vector<8x128xf32> to vector<8x128xbf16>
    %cst_102 = arith.constant dense<0.000000e+00> : vector<8x512xf32>
    %217 = tpu.matmul %216, %3, %cst_102 {dimension_numbers = #tpu.dot_dimension_numbers<[1], [0], [0], [1], [0, 0, 1, 1], [], []>} : vector<8x128xbf16>, vector<128x512xbf16>, vector<8x512xf32> -> vector<8x512xf32>
    %218 = arith.index_cast %c6_i32 : i32 to index
    %c0_103 = arith.constant 0 : index
    %c0_104 = arith.constant 0 : index
    %219 = vector.load %arg1[%218, %c0_103, %c0_104] : memref<8x8x512xbf16, #tpu.memory_space<vmem>>, vector<1x8x512xbf16>
    %220 = vector.shape_cast %219 : vector<1x8x512xbf16> to vector<8x512xbf16>
    %221 = arith.extf %220 : vector<8x512xbf16> to vector<8x512xf32>
    %222 = arith.addf %221, %217 : vector<8x512xf32>
    %223 = vector.extract_strided_slice %222 {offsets = [0, 0], sizes = [8, 384], strides = [1, 1]} : vector<8x512xf32> to vector<8x384xf32>
    %224 = arith.negf %223 : vector<8x384xf32>
    %225 = math.exp %224 : vector<8x384xf32>
    %cst_105 = arith.constant 1.000000e+00 : f32
    %226 = vector.broadcast %cst_105 : f32 to vector<8x384xf32>
    %227 = arith.addf %226, %225 : vector<8x384xf32>
    %228 = arith.divf %226, %227 : vector<8x384xf32>
    %229 = vector.extract_strided_slice %222 {offsets = [0, 384], sizes = [8, 128], strides = [1, 1]} : vector<8x512xf32> to vector<8x128xf32>
    %230 = math.tanh %229 : vector<8x128xf32>
    %231 = vector.extract_strided_slice %228 {offsets = [0, 0], sizes = [8, 128], strides = [1, 1]} : vector<8x384xf32> to vector<8x128xf32>
    %232 = vector.extract_strided_slice %228 {offsets = [0, 128], sizes = [8, 128], strides = [1, 1]} : vector<8x384xf32> to vector<8x128xf32>
    %233 = vector.extract_strided_slice %228 {offsets = [0, 256], sizes = [8, 128], strides = [1, 1]} : vector<8x384xf32> to vector<8x128xf32>
    %234 = arith.mulf %232, %215 : vector<8x128xf32>
    %235 = arith.mulf %231, %230 : vector<8x128xf32>
    %236 = arith.addf %234, %235 : vector<8x128xf32>
    %237 = math.tanh %236 : vector<8x128xf32>
    %238 = arith.mulf %233, %237 : vector<8x128xf32>
    %c0_106 = arith.constant 0 : index
    %c0_107 = arith.constant 0 : index
    %239 = vector.load %arg7[%c0_106, %c0_107] : memref<8x128xf32, #tpu.memory_space<vmem>>, vector<8x128xf32>
    tpu.vector_store %arg7[%c0_106, %c0_107], %238 {strides = array<i32>} : memref<8x128xf32, #tpu.memory_space<vmem>>, vector<8x128xf32>,
    %c0_108 = arith.constant 0 : index
    %c0_109 = arith.constant 0 : index
    %240 = vector.load %arg8[%c0_108, %c0_109] : memref<8x128xf32, #tpu.memory_space<vmem>>, vector<8x128xf32>
    tpu.vector_store %arg8[%c0_108, %c0_109], %236 {strides = array<i32>} : memref<8x128xf32, #tpu.memory_space<vmem>>, vector<8x128xf32>,
    %241 = arith.index_cast %c6_i32 : i32 to index
    %c0_110 = arith.constant 0 : index
    %c0_111 = arith.constant 0 : index
    %242 = vector.load %arg5[%241, %c0_110, %c0_111] : memref<8x8x128xf32, #tpu.memory_space<vmem>>, vector<1x8x128xf32>
    %243 = vector.shape_cast %242 : vector<1x8x128xf32> to vector<8x128xf32>
    %244 = vector.shape_cast %238 : vector<8x128xf32> to vector<1x8x128xf32>
    tpu.vector_store %arg5[%241, %c0_110, %c0_111], %244 {strides = array<i32>} : memref<8x8x128xf32, #tpu.memory_space<vmem>>, vector<1x8x128xf32>,
    %245 = arith.index_cast %c6_i32 : i32 to index
    %c0_112 = arith.constant 0 : index
    %c0_113 = arith.constant 0 : index
    %246 = vector.load %arg6[%245, %c0_112, %c0_113] : memref<8x8x128xf32, #tpu.memory_space<vmem>>, vector<1x8x128xf32>
    %247 = vector.shape_cast %246 : vector<1x8x128xf32> to vector<8x128xf32>
    %248 = vector.shape_cast %236 : vector<8x128xf32> to vector<1x8x128xf32>
    tpu.vector_store %arg6[%245, %c0_112, %c0_113], %248 {strides = array<i32>} : memref<8x8x128xf32, #tpu.memory_space<vmem>>, vector<1x8x128xf32>,
    %c7_i32 = arith.constant 7 : i32
    %c0_114 = arith.constant 0 : index
    %c0_115 = arith.constant 0 : index
    %249 = vector.load %arg7[%c0_114, %c0_115] : memref<8x128xf32, #tpu.memory_space<vmem>>, vector<8x128xf32>
    %c0_116 = arith.constant 0 : index
    %c0_117 = arith.constant 0 : index
    %250 = vector.load %arg8[%c0_116, %c0_117] : memref<8x128xf32, #tpu.memory_space<vmem>>, vector<8x128xf32>
    %251 = arith.truncf %249 : vector<8x128xf32> to vector<8x128xbf16>
    %cst_118 = arith.constant dense<0.000000e+00> : vector<8x512xf32>
    %252 = tpu.matmul %251, %3, %cst_118 {dimension_numbers = #tpu.dot_dimension_numbers<[1], [0], [0], [1], [0, 0, 1, 1], [], []>} : vector<8x128xbf16>, vector<128x512xbf16>, vector<8x512xf32> -> vector<8x512xf32>
    %253 = arith.index_cast %c7_i32 : i32 to index
    %c0_119 = arith.constant 0 : index
    %c0_120 = arith.constant 0 : index
    %254 = vector.load %arg1[%253, %c0_119, %c0_120] : memref<8x8x512xbf16, #tpu.memory_space<vmem>>, vector<1x8x512xbf16>
    %255 = vector.shape_cast %254 : vector<1x8x512xbf16> to vector<8x512xbf16>
    %256 = arith.extf %255 : vector<8x512xbf16> to vector<8x512xf32>
    %257 = arith.addf %256, %252 : vector<8x512xf32>
    %258 = vector.extract_strided_slice %257 {offsets = [0, 0], sizes = [8, 384], strides = [1, 1]} : vector<8x512xf32> to vector<8x384xf32>
    %259 = arith.negf %258 : vector<8x384xf32>
    %260 = math.exp %259 : vector<8x384xf32>
    %cst_121 = arith.constant 1.000000e+00 : f32
    %261 = vector.broadcast %cst_121 : f32 to vector<8x384xf32>
    %262 = arith.addf %261, %260 : vector<8x384xf32>
    %263 = arith.divf %261, %262 : vector<8x384xf32>
    %264 = vector.extract_strided_slice %257 {offsets = [0, 384], sizes = [8, 128], strides = [1, 1]} : vector<8x512xf32> to vector<8x128xf32>
    %265 = math.tanh %264 : vector<8x128xf32>
    %266 = vector.extract_strided_slice %263 {offsets = [0, 0], sizes = [8, 128], strides = [1, 1]} : vector<8x384xf32> to vector<8x128xf32>
    %267 = vector.extract_strided_slice %263 {offsets = [0, 128], sizes = [8, 128], strides = [1, 1]} : vector<8x384xf32> to vector<8x128xf32>
    %268 = vector.extract_strided_slice %263 {offsets = [0, 256], sizes = [8, 128], strides = [1, 1]} : vector<8x384xf32> to vector<8x128xf32>
    %269 = arith.mulf %267, %250 : vector<8x128xf32>
    %270 = arith.mulf %266, %265 : vector<8x128xf32>
    %271 = arith.addf %269, %270 : vector<8x128xf32>
    %272 = math.tanh %271 : vector<8x128xf32>
    %273 = arith.mulf %268, %272 : vector<8x128xf32>
    %c0_122 = arith.constant 0 : index
    %c0_123 = arith.constant 0 : index
    %274 = vector.load %arg7[%c0_122, %c0_123] : memref<8x128xf32, #tpu.memory_space<vmem>>, vector<8x128xf32>
    tpu.vector_store %arg7[%c0_122, %c0_123], %273 {strides = array<i32>} : memref<8x128xf32, #tpu.memory_space<vmem>>, vector<8x128xf32>,
    %c0_124 = arith.constant 0 : index
    %c0_125 = arith.constant 0 : index
    %275 = vector.load %arg8[%c0_124, %c0_125] : memref<8x128xf32, #tpu.memory_space<vmem>>, vector<8x128xf32>
    tpu.vector_store %arg8[%c0_124, %c0_125], %271 {strides = array<i32>} : memref<8x128xf32, #tpu.memory_space<vmem>>, vector<8x128xf32>,
    %276 = arith.index_cast %c7_i32 : i32 to index
    %c0_126 = arith.constant 0 : index
    %c0_127 = arith.constant 0 : index
    %277 = vector.load %arg5[%276, %c0_126, %c0_127] : memref<8x8x128xf32, #tpu.memory_space<vmem>>, vector<1x8x128xf32>
    %278 = vector.shape_cast %277 : vector<1x8x128xf32> to vector<8x128xf32>
    %279 = vector.shape_cast %273 : vector<8x128xf32> to vector<1x8x128xf32>
    tpu.vector_store %arg5[%276, %c0_126, %c0_127], %279 {strides = array<i32>} : memref<8x8x128xf32, #tpu.memory_space<vmem>>, vector<1x8x128xf32>,
    %280 = arith.index_cast %c7_i32 : i32 to index
    %c0_128 = arith.constant 0 : index
    %c0_129 = arith.constant 0 : index
    %281 = vector.load %arg6[%280, %c0_128, %c0_129] : memref<8x8x128xf32, #tpu.memory_space<vmem>>, vector<1x8x128xf32>
    %282 = vector.shape_cast %281 : vector<1x8x128xf32> to vector<8x128xf32>
    %283 = vector.shape_cast %271 : vector<8x128xf32> to vector<1x8x128xf32>
    tpu.vector_store %arg6[%280, %c0_128, %c0_129], %283 {strides = array<i32>} : memref<8x8x128xf32, #tpu.memory_space<vmem>>, vector<1x8x128xf32>,
    %c8_i32 = arith.constant 8 : i32
    return
  }
  func.func @transform_0(%arg0: i32) -> (i32, i32, i32) {
    %c0_i32 = arith.constant 0 : i32
    %c0_i32_0 = arith.constant 0 : i32
    %c0_i32_1 = arith.constant 0 : i32
    return %arg0, %c0_i32, %c0_i32_0 : i32, i32, i32
  }
  func.func @transform_1(%arg0: i32) -> (i32, i32) {
    %c0_i32 = arith.constant 0 : i32
    %c0_i32_0 = arith.constant 0 : i32
    %c0_i32_1 = arith.constant 0 : i32
    return %c0_i32, %c0_i32_0 : i32, i32
  }
  func.func @transform_2(%arg0: i32) -> (i32, i32) {
    %c0_i32 = arith.constant 0 : i32
    %c0_i32_0 = arith.constant 0 : i32
    %c0_i32_1 = arith.constant 0 : i32
    return %c0_i32, %c0_i32_0 : i32, i32
  }
  func.func @transform_3(%arg0: i32) -> (i32, i32) {
    %c0_i32 = arith.constant 0 : i32
    %c0_i32_0 = arith.constant 0 : i32
    %c0_i32_1 = arith.constant 0 : i32
    return %c0_i32, %c0_i32_0 : i32, i32
  }
  func.func @transform_4(%arg0: i32) -> (i32, i32, i32) {
    %c0_i32 = arith.constant 0 : i32
    %c0_i32_0 = arith.constant 0 : i32
    %c0_i32_1 = arith.constant 0 : i32
    return %arg0, %c0_i32, %c0_i32_0 : i32, i32, i32
  }
  func.func @transform_5(%arg0: i32) -> (i32, i32, i32) {
    %c0_i32 = arith.constant 0 : i32
    %c0_i32_0 = arith.constant 0 : i32
    %c0_i32_1 = arith.constant 0 : i32
    return %arg0, %c0_i32, %c0_i32_0 : i32, i32, i32
  }
}

</mosaic_0001>

<llo_original>
// kernel: lstm_sequence_forward.1
$region0: #{lstm_sequence_forward.1}
  #allocation0 [shape = 'u32[]', space=smem, size = 0x4, offset = 0x4, fixed_abs, tag = 'smem constant byte address 0x4 - core index']
  #allocation1 [shape = 'u32[144,128]{1,0:T(1,128)}', space=vmem, size = 0x12000, scoped, tag = 'internal scratch']
  #allocation2 [shape = 'f32[8,128]{1,0:T(8,128)}', space=vmem, size = 0x1000, scoped, tag = 'scratch operand']
  #allocation3 [shape = 'f32[8,128]{1,0:T(8,128)}', space=vmem, size = 0x1000, scoped, tag = 'scratch operand']
  %s0 = inlined_call_operand.vmem [shape: bf16[16,8,512], index: 0, kind: input, shape index: {}]
  %s1 = inlined_call_operand.vmem [shape: f32[8,128], index: 1, kind: input, shape index: {}]
  %s2 = inlined_call_operand.vmem [shape: f32[8,128], index: 2, kind: input, shape index: {}]
  %s3 = inlined_call_operand.vmem [shape: bf16[128,512], index: 3, kind: input, shape index: {}]
  %s4 = inlined_call_operand.hbm [shape: f32[16,8,128], index: 4, kind: output, shape index: {0}]
  %s5 = inlined_call_operand.hbm [shape: f32[16,8,128], index: 5, kind: output, shape index: {1}]
  %6 = xla_tuple %s4, %s5
  %s7 = sld [smem:[#allocation0]]
  $region61: #{lstm_sequence_forward.1} parent=0
    _
  %s9 = ssub.s32 1, %s7
  %s10 = scalar_select 0, %s9, %s7
  $region1: #{lstm_sequence_forward.1} parent=0
    #allocation4 [shape = 'u8[65536]{0}', space=vmem, size = 0x10000, scoped, tag = 'output window, operand 0']
    #allocation5 [shape = 's32[2]{0}', space=sflag, size = 0x8, scoped, tag = 'scoped memory for lstm_sequence_forward.1']
    #allocation6 [shape = 'u8[65536]{0}', space=vmem, size = 0x10000, scoped, tag = 'output window, operand 1']
    #allocation7 [shape = 's32[2]{0}', space=sflag, size = 0x8, scoped, tag = 'scoped memory for lstm_sequence_forward.1']
    %11 = vsyncpa [#allocation5], 0
    %s12 = scalar_lea.sflag [#allocation5], 1
    %13 = vsyncpa %s12, 0
    %14 = vsyncpa [#allocation7], 0
    %s15 = scalar_lea.sflag [#allocation7], 1
    %16 = vsyncpa %s15, 0
    loop: start=0, step=1, limit=4
    $region2: #{lstm_sequence_forward.1} parent=1 // loop_pre_header
      _
    $region3: #{lstm_sequence_forward.1} parent=1 // loop_header
      %s18 = sphi 0, %s22
      %p19 = scmp.ge.s32.totalorder %s18, 4
      %s28 = sphi 0, %s30
      %s31 = sphi 0, %s28
      %s32 = sphi 0, %s31
      %s48 = sphi 0, %s32
      %s52 = sphi 0, %s52
      %s54 = sphi 0, %s52
      %s55 = sphi 0, %s54
      %s69 = sphi 0, %s55
      %s73 = sphi 0, %s73
      %s75 = sphi 0, %s73
      %s76 = sphi 0, %s75
      %s90 = sphi 0, %s76
      %s94 = sphi 0, %s94
      %s96 = sphi 0, %s94
      %s97 = sphi 0, %s96
      %s111 = sphi 0, %s97
      %s117 = sphi 0, %s119
      %s120 = sphi 0, %s117
      %s121 = sphi 0, %s120
      %s137 = sphi 0, %s121
      %s143 = sphi 0, %s145
      %s146 = sphi 0, %s143
      %s147 = sphi 0, %s146
      %s163 = sphi 0, %s147
    $region4: #{lstm_sequence_forward.1} parent=1 // loop_header_branch
      %21 = sbr.rel (%p19) target = $region8
    $region5: #{lstm_sequence_forward.1} parent=1 // loop_body
      %s23 = ssub.s32 %s18, 1
      %s24 = ssub.s32 %s18, 2
      %s25 = sadd.s32 %s18, 1
      %s26 = ssub.s32 %s18, %s25
      %p27 = scmp.eq.s32.totalorder %s26, 0
      %s29 = sadd.s32 %s28, 1
      %s30 = scalar_select %p27, %s28, %s29
      %p33 = pneg %p27
      %p34 = scmp.eq.s32.totalorder %s18, 1
      %p35 = por %p33, %p34
      %p36 = scmp.ne.s32.totalorder %s28, %s31
      %p37 = scmp.eq.s32.totalorder %s18, 0
      %p38 = por %p36, %p37
      %p39 = scmp.ne.s32.totalorder %s28, %s31
      %p40 = scmp.eq.s32.totalorder %s23, 1
      %p41 = por %p39, %p40
      %p42 = scmp.ne.s32.totalorder %s31, %s32
      %p43 = scmp.eq.s32.totalorder %s23, 0
      %p44 = por %p42, %p43
      %p45 = scmp.ne.s32.totalorder %s31, %s32
      %p46 = scmp.eq.s32.totalorder %s24, 1
      %p47 = por %p45, %p46
      %p49 = scmp.ne.s32.totalorder %s32, %s48
      %p50 = scmp.eq.s32.totalorder %s24, 0
      %p51 = por %p49, %p50
      %s53 = sadd.s32 %s52, 1
      %p56 = scmp.eq.s32.totalorder %s18, 1
      %p57 = scmp.ne.s32.totalorder %s52, %s54
      %p58 = scmp.eq.s32.totalorder %s18, 0
      %p59 = por %p57, %p58
      %p60 = scmp.ne.s32.totalorder %s52, %s54
      %p61 = scmp.eq.s32.totalorder %s23, 1
      %p62 = por %p60, %p61
      %p63 = scmp.ne.s32.totalorder %s54, %s55
      %p64 = scmp.eq.s32.totalorder %s23, 0
      %p65 = por %p63, %p64
      %p66 = scmp.ne.s32.totalorder %s54, %s55
      %p67 = scmp.eq.s32.totalorder %s24, 1
      %p68 = por %p66, %p67
      %p70 = scmp.ne.s32.totalorder %s55, %s69
      %p71 = scmp.eq.s32.totalorder %s24, 0
      %p72 = por %p70, %p71
      %s74 = sadd.s32 %s73, 1
      %p77 = scmp.eq.s32.totalorder %s18, 1
      %p78 = scmp.ne.s32.totalorder %s73, %s75
      %p79 = scmp.eq.s32.totalorder %s18, 0
      %p80 = por %p78, %p79
      %p81 = scmp.ne.s32.totalorder %s73, %s75
      %p82 = scmp.eq.s32.totalorder %s23, 1
      %p83 = por %p81, %p82
      %p84 = scmp.ne.s32.totalorder %s75, %s76
      %p85 = scmp.eq.s32.totalorder %s23, 0
      %p86 = por %p84, %p85
      %p87 = scmp.ne.s32.totalorder %s75, %s76
      %p88 = scmp.eq.s32.totalorder %s24, 1
      %p89 = por %p87, %p88
      %p91 = scmp.ne.s32.totalorder %s76, %s90
      %p92 = scmp.eq.s32.totalorder %s24, 0
      %p93 = por %p91, %p92
      %s95 = sadd.s32 %s94, 1
      %p98 = scmp.eq.s32.totalorder %s18, 1
      %p99 = scmp.ne.s32.totalorder %s94, %s96
      %p100 = scmp.eq.s32.totalorder %s18, 0
      %p101 = por %p99, %p100
      %p102 = scmp.ne.s32.totalorder %s94, %s96
      %p103 = scmp.eq.s32.totalorder %s23, 1
      %p104 = por %p102, %p103
      %p105 = scmp.ne.s32.totalorder %s96, %s97
      %p106 = scmp.eq.s32.totalorder %s23, 0
      %p107 = por %p105, %p106
      %p108 = scmp.ne.s32.totalorder %s96, %s97
      %p109 = scmp.eq.s32.totalorder %s24, 1
      %p110 = por %p108, %p109
      %p112 = scmp.ne.s32.totalorder %s97, %s111
      %p113 = scmp.eq.s32.totalorder %s24, 0
      %p114 = por %p112, %p113
      %s115 = ssub.s32 %s18, %s25
      %p116 = scmp.eq.s32.totalorder %s115, 0
      %s118 = sadd.s32 %s117, 1
      %s119 = scalar_select %p116, %s117, %s118
      %p122 = pneg %p116
      %p123 = scmp.eq.s32.totalorder %s18, 1
      %p124 = por %p122, %p123
      %p125 = scmp.ne.s32.totalorder %s117, %s120
      %p126 = scmp.eq.s32.totalorder %s18, 0
      %p127 = por %p125, %p126
      %p128 = scmp.ne.s32.totalorder %s117, %s120
      %p129 = scmp.eq.s32.totalorder %s23, 1
      %p130 = por %p128, %p129
      %p131 = scmp.ne.s32.totalorder %s120, %s121
      %p132 = scmp.eq.s32.totalorder %s23, 0
      %p133 = por %p131, %p132
      %p134 = scmp.ne.s32.totalorder %s120, %s121
      %p135 = scmp.eq.s32.totalorder %s24, 1
      %p136 = por %p134, %p135
      %p138 = scmp.ne.s32.totalorder %s121, %s137
      %p139 = scmp.eq.s32.totalorder %s24, 0
      %p140 = por %p138, %p139
      %s141 = ssub.s32 %s18, %s25
      %p142 = scmp.eq.s32.totalorder %s141, 0
      %s144 = sadd.s32 %s143, 1
      %s145 = scalar_select %p142, %s143, %s144
      %p148 = pneg %p142
      %p149 = scmp.eq.s32.totalorder %s18, 1
      %p150 = por %p148, %p149
      %p151 = scmp.ne.s32.totalorder %s143, %s146
      %p152 = scmp.eq.s32.totalorder %s18, 0
      %p153 = por %p151, %p152
      %p154 = scmp.ne.s32.totalorder %s143, %s146
      %p155 = scmp.eq.s32.totalorder %s23, 1
      %p156 = por %p154, %p155
      %p157 = scmp.ne.s32.totalorder %s146, %s147
      %p158 = scmp.eq.s32.totalorder %s23, 0
      %p159 = por %p157, %p158
      %p160 = scmp.ne.s32.totalorder %s146, %s147
      %p161 = scmp.eq.s32.totalorder %s24, 1
      %p162 = por %p160, %p161
      %p164 = scmp.ne.s32.totalorder %s147, %s163
      %p165 = scmp.eq.s32.totalorder %s24, 0
      %p166 = por %p164, %p165
      %p167 = scmp.le.s32.totalorder 1, %s18
      %p168 = scmp.lt.s32.totalorder %s18, 3
      %p169 = pnand %p167, %p168
      %p170 = pneg %p169
      // Predicated region
      $region9: #{lstm_sequence_forward.1} parent=5 // pred_check
        _
      $region10: #{lstm_sequence_forward.1} parent=5 // pred_check_branch
        %172 = sbr.rel (%p169) target = $region12
      $region11: #{lstm_sequence_forward.1} parent=5 // pred_region
        %s173 = ssub.s32 %s18, 1
        // Predicated region
        $region13: #{lstm_sequence_forward.1} parent=11 // pred_check
          %p174 = pneg %p65
        $region14: #{lstm_sequence_forward.1} parent=11 // pred_check_branch
          %176 = sbr.rel (%p174) target = $region16
        $region15: #{lstm_sequence_forward.1} parent=11 // pred_region
          _
        $region16: #{lstm_sequence_forward.1} parent=11 // pred_fallthru
          _
        // Predicated region
        $region17: #{lstm_sequence_forward.1} parent=11 // pred_check
          %p177 = pneg %p86
        $region18: #{lstm_sequence_forward.1} parent=11 // pred_check_branch
          %179 = sbr.rel (%p177) target = $region20
        $region19: #{lstm_sequence_forward.1} parent=11 // pred_region
          _
        $region20: #{lstm_sequence_forward.1} parent=11 // pred_fallthru
          _
        // Predicated region
        $region21: #{lstm_sequence_forward.1} parent=11 // pred_check
          %p180 = pneg %p107
        $region22: #{lstm_sequence_forward.1} parent=11 // pred_check_branch
          %182 = sbr.rel (%p180) target = $region24
        $region23: #{lstm_sequence_forward.1} parent=11 // pred_region
          _
        $region24: #{lstm_sequence_forward.1} parent=11 // pred_fallthru
          _
      $region12: #{lstm_sequence_forward.1} parent=5 // pred_fallthru
        _
      %p183 = scmp.lt.s32.totalorder %s18, 2
      // Predicated region
      $region25: #{lstm_sequence_forward.1} parent=5 // pred_check
        %p184 = pneg %p183
      $region26: #{lstm_sequence_forward.1} parent=5 // pred_check_branch
        %186 = sbr.rel (%p184) target = $region28
      $region27: #{lstm_sequence_forward.1} parent=5 // pred_region
        // Predicated region
        $region29: #{lstm_sequence_forward.1} parent=27 // pred_check
          %p187 = pneg %p38
        $region30: #{lstm_sequence_forward.1} parent=27 // pred_check_branch
          %189 = sbr.rel (%p187) target = $region32
        $region31: #{lstm_sequence_forward.1} parent=27 // pred_region
          %s190 = smul.u32 8, %s18
          %p191 = scmp.lt.s32.totalorder %s190, 15
          %s192 = scalar_select %p191, %s190, 15
          %s193 = smul.addr %s192, 4
          %s194 = smul.addr %s193, 4
          %s195 = scalar_lea.vmem %s0, %s194
          %s196 = smul.u32 8, %s18
        $region32: #{lstm_sequence_forward.1} parent=27 // pred_fallthru
          _
      $region28: #{lstm_sequence_forward.1} parent=5 // pred_fallthru
        _
      %p197 = scmp.le.s32.totalorder 1, %s18
      %p198 = scmp.lt.s32.totalorder %s18, 3
      %p199 = pnand %p197, %p198
      %p200 = pneg %p199
      // Predicated region
      $region33: #{lstm_sequence_forward.1} parent=5 // pred_check
        _
      $region34: #{lstm_sequence_forward.1} parent=5 // pred_check_branch
        %202 = sbr.rel (%p199) target = $region36
      $region35: #{lstm_sequence_forward.1} parent=5 // pred_region
        %s203 = ssub.s32 %s18, 1
        %s204 = smul.u32 8, %s23
        %p205 = scmp.lt.s32.totalorder %s204, 15
        %s206 = scalar_select %p205, %s204, 15
        %s207 = smul.addr %s206, 4
        %s208 = smul.addr %s207, 4
        %s209 = scalar_lea.vmem %s0, %s208
        %p210 = pneg %p44
        %p211 = pneg %p41
        %p212 = pneg %p65
        %p213 = pneg %p62
        %p214 = pneg %p86
        %p215 = pneg %p83
        %p216 = pneg %p107
        %p217 = pneg %p104
        %p218 = pneg %p133
        %p219 = pneg %p130
        %s220 = sand.u32 %s120, 1
        %s221 = scalar_lea.sflag [#allocation5], %s220
        %s222 = sand.u32 %s120, 1
        %s223 = smul.addr %s222, 64
        %s224 = scalar_lea.vmem [#allocation4], %s223
        %p225 = pneg %p159
        %p226 = pneg %p156
        %s227 = sand.u32 %s146, 1
        %s228 = scalar_lea.sflag [#allocation7], %s227
        %s229 = sand.u32 %s146, 1
        %s230 = smul.addr %s229, 64
        %s231 = scalar_lea.vmem [#allocation6], %s230
        %s232 = smul.u32 8, %s23
        %p233 = scmp.lt.s32.totalorder %s232, 15
        %s234 = scalar_select %p233, %s232, 15
        %s235 = smul.addr %s234, 4
        %s236 = smul.addr %s235, 4
        %s237 = scalar_lea.vmem %s0, %s236
        %s238 = smul.u32 8, %s23
        %s239 = smul.u32 8, %s23
        %s240 = smul.u32 8, %s23
        %p242 = scmp.eq.s32.totalorder %s23, 0
        // Predicated region
        $region37: #{lstm_sequence_forward.1} parent=35 // pred_check
          %p243 = pneg %p242
        $region38: #{lstm_sequence_forward.1} parent=35 // pred_check_branch
          %245 = sbr.rel (%p243) target = $region40
        $region39: #{lstm_sequence_forward.1} parent=35 // pred_region
          %v246 = vld [vmem:[%s1] sm:$0xff]
          %247 = vst [vmem:[#allocation2] sm:$0xff] %v246
          %v248 = vld [vmem:[%s2] sm:$0xff]
          %249 = vst [vmem:[#allocation3] sm:$0xff] %v248
        $region40: #{lstm_sequence_forward.1} parent=35 // pred_fallthru
          _
        %v250 = vld [vmem:[%s3] sm:$0xff]
        %v251 = vld [vmem:[%s3 + $0x8] sm:$0xff]
        %v252 = vld [vmem:[%s3 + $0x10] sm:$0xff]
        %v253 = vld [vmem:[%s3 + $0x18] sm:$0xff]
        %v254 = vld [vmem:[%s3 + $0x20] sm:$0xff]
        %v255 = vld [vmem:[%s3 + $0x28] sm:$0xff]
        %v256 = vld [vmem:[%s3 + $0x30] sm:$0xff]
        %v257 = vld [vmem:[%s3 + $0x38] sm:$0xff]
        %v258 = vld [vmem:[%s3 + $0x40] sm:$0xff]
        %v259 = vld [vmem:[%s3 + $0x48] sm:$0xff]
        %v260 = vld [vmem:[%s3 + $0x50] sm:$0xff]
        %v261 = vld [vmem:[%s3 + $0x58] sm:$0xff]
        %v262 = vld [vmem:[%s3 + $0x60] sm:$0xff]
        %v263 = vld [vmem:[%s3 + $0x68] sm:$0xff]
        %v264 = vld [vmem:[%s3 + $0x70] sm:$0xff]
        %v265 = vld [vmem:[%s3 + $0x78] sm:$0xff]
        %v266 = vld [vmem:[%s3 + $0x80] sm:$0xff]
        %v267 = vld [vmem:[%s3 + $0x88] sm:$0xff]
        %v268 = vld [vmem:[%s3 + $0x90] sm:$0xff]
        %v269 = vld [vmem:[%s3 + $0x98] sm:$0xff]
        %v270 = vld [vmem:[%s3 + $0xa0] sm:$0xff]
        %v271 = vld [vmem:[%s3 + $0xa8] sm:$0xff]
        %v272 = vld [vmem:[%s3 + $0xb0] sm:$0xff]
        %v273 = vld [vmem:[%s3 + $0xb8] sm:$0xff]
        %v274 = vld [vmem:[%s3 + $0xc0] sm:$0xff]
        %v275 = vld [vmem:[%s3 + $0xc8] sm:$0xff]
        %v276 = vld [vmem:[%s3 + $0xd0] sm:$0xff]
        %v277 = vld [vmem:[%s3 + $0xd8] sm:$0xff]
        %v278 = vld [vmem:[%s3 + $0xe0] sm:$0xff]
        %v279 = vld [vmem:[%s3 + $0xe8] sm:$0xff]
        %v280 = vld [vmem:[%s3 + $0xf0] sm:$0xff]
        %v281 = vld [vmem:[%s3 + $0xf8] sm:$0xff]
        %v282 = vld [vmem:[#allocation2] sm:$0xff]
        %v283 = vld [vmem:[#allocation3] sm:$0xff]
        %v284 = vpack.c.bf16 %v282, %v282
        %v317 = vunpack.c.l.b16 %v250
        %v318 = vunpack.c.h.b16 %v250
        %v319 = vunpack.c.l.b16 %v251
        %v320 = vunpack.c.h.b16 %v251
        %v321 = vunpack.c.l.b16 %v252
        %v322 = vunpack.c.h.b16 %v252
        %v323 = vunpack.c.l.b16 %v253
        %v324 = vunpack.c.h.b16 %v253
        %v325 = vunpack.c.l.b16 %v254
        %v326 = vunpack.c.h.b16 %v254
        %v327 = vunpack.c.l.b16 %v255
        %v328 = vunpack.c.h.b16 %v255
        %v329 = vunpack.c.l.b16 %v256
        %v330 = vunpack.c.h.b16 %v256
        %v331 = vunpack.c.l.b16 %v257
        %v332 = vunpack.c.h.b16 %v257
        %v333 = vunpack.c.l.b16 %v258
        %v334 = vunpack.c.h.b16 %v258
        %v335 = vunpack.c.l.b16 %v259
        %v336 = vunpack.c.h.b16 %v259
        %v337 = vunpack.c.l.b16 %v260
        %v338 = vunpack.c.h.b16 %v260
        %v339 = vunpack.c.l.b16 %v261
        %v340 = vunpack.c.h.b16 %v261
        %v341 = vunpack.c.l.b16 %v262
        %v342 = vunpack.c.h.b16 %v262
        %v343 = vunpack.c.l.b16 %v263
        %v344 = vunpack.c.h.b16 %v263
        %v345 = vunpack.c.l.b16 %v264
        %v346 = vunpack.c.h.b16 %v264
        %v347 = vunpack.c.l.b16 %v265
        %v348 = vunpack.c.h.b16 %v265
        %v349 = vunpack.c.l.b16 %v266
        %v350 = vunpack.c.h.b16 %v266
        %v351 = vunpack.c.l.b16 %v267
        %v352 = vunpack.c.h.b16 %v267
        %v353 = vunpack.c.l.b16 %v268
        %v354 = vunpack.c.h.b16 %v268
        %v355 = vunpack.c.l.b16 %v269
        %v356 = vunpack.c.h.b16 %v269
        %v357 = vunpack.c.l.b16 %v270
        %v358 = vunpack.c.h.b16 %v270
        %v359 = vunpack.c.l.b16 %v271
        %v360 = vunpack.c.h.b16 %v271
        %v361 = vunpack.c.l.b16 %v272
        %v362 = vunpack.c.h.b16 %v272
        %v363 = vunpack.c.l.b16 %v273
        %v364 = vunpack.c.h.b16 %v273
        %v365 = vunpack.c.l.b16 %v274
        %v366 = vunpack.c.h.b16 %v274
        %v367 = vunpack.c.l.b16 %v275
        %v368 = vunpack.c.h.b16 %v275
        %v369 = vunpack.c.l.b16 %v276
        %v370 = vunpack.c.h.b16 %v276
        %v371 = vunpack.c.l.b16 %v277
        %v372 = vunpack.c.h.b16 %v277
        %v373 = vunpack.c.l.b16 %v278
        %v374 = vunpack.c.h.b16 %v278
        %v375 = vunpack.c.l.b16 %v279
        %v376 = vunpack.c.h.b16 %v279
        %v377 = vunpack.c.l.b16 %v280
        %v378 = vunpack.c.h.b16 %v280
        %v379 = vunpack.c.l.b16 %v281
        %v380 = vunpack.c.h.b16 %v281
        %v381 = vpack.c.b16 %v321, %v317
        %v382 = vpack.c.b16 %v322, %v318
        %v383 = vpack.c.b16 %v323, %v319
        %v384 = vpack.c.b16 %v324, %v320
        %v385 = vpack.c.b16 %v329, %v325
        %v386 = vpack.c.b16 %v330, %v326
        %v387 = vpack.c.b16 %v331, %v327
        %v388 = vpack.c.b16 %v332, %v328
        %v389 = vpack.c.b16 %v337, %v333
        %v390 = vpack.c.b16 %v338, %v334
        %v391 = vpack.c.b16 %v339, %v335
        %v392 = vpack.c.b16 %v340, %v336
        %v393 = vpack.c.b16 %v345, %v341
        %v394 = vpack.c.b16 %v346, %v342
        %v395 = vpack.c.b16 %v347, %v343
        %v396 = vpack.c.b16 %v348, %v344
        %v397 = vpack.c.b16 %v353, %v349
        %v398 = vpack.c.b16 %v354, %v350
        %v399 = vpack.c.b16 %v355, %v351
        %v400 = vpack.c.b16 %v356, %v352
        %v401 = vpack.c.b16 %v361, %v357
        %v402 = vpack.c.b16 %v362, %v358
        %v403 = vpack.c.b16 %v363, %v359
        %v404 = vpack.c.b16 %v364, %v360
        %v405 = vpack.c.b16 %v369, %v365
        %v406 = vpack.c.b16 %v370, %v366
        %v407 = vpack.c.b16 %v371, %v367
        %v408 = vpack.c.b16 %v372, %v368
        %v409 = vpack.c.b16 %v377, %v373
        %v410 = vpack.c.b16 %v378, %v374
        %v411 = vpack.c.b16 %v379, %v375
        %v412 = vpack.c.b16 %v380, %v376
        %445 = vmatprep.subr.bf16.mxu0 %v382
        %446 = vmatpush1.bf16.msra.mxu0 %v381
        %447 = vmatprep.subr.bf16.mxu0 %v386
        %448 = vmatpush1.bf16.msra.mxu0 %v385
        %449 = vmatprep.subr.bf16.mxu0 %v390
        %450 = vmatpush1.bf16.msra.mxu0 %v389
        %451 = vmatprep.subr.bf16.mxu0 %v394
        %452 = vmatpush1.bf16.msra.mxu0 %v393
        %453 = vmatprep.subr.bf16.mxu0 %v398
        %454 = vmatpush1.bf16.msra.mxu0 %v397
        %455 = vmatprep.subr.bf16.mxu0 %v402
        %456 = vmatpush1.bf16.msra.mxu0 %v401
        %457 = vmatprep.subr.bf16.mxu0 %v406
        %458 = vmatpush1.bf16.msra.mxu0 %v405
        %459 = vmatprep.subr.bf16.mxu0 %v410
        %460 = vmatpush1.bf16.msra.mxu0 %v409
        %461 = vmatprep.subr.bf16.mxu0 0
        %462 = vmatpush1.bf16.msra.mxu0 0
        %463 = vmatprep.subr.bf16.mxu0 0
        %464 = vmatpush1.bf16.msra.mxu0 0
        %465 = vmatprep.subr.bf16.mxu0 0
        %466 = vmatpush1.bf16.msra.mxu0 0
        %467 = vmatprep.subr.bf16.mxu0 0
        %468 = vmatpush1.bf16.msra.mxu0 0
        %469 = vmatprep.subr.bf16.mxu0 0
        %470 = vmatpush1.bf16.msra.mxu0 0
        %471 = vmatprep.subr.bf16.mxu0 0
        %472 = vmatpush1.bf16.msra.mxu0 0
        %473 = vmatprep.subr.bf16.mxu0 0
        %474 = vmatpush1.bf16.msra.mxu0 0
        %475 = vmatprep.subr.bf16.mxu0 0
        %476 = vmatpush1.bf16.msra.mxu0 0
        %477 = vmatprep.mubr.bf16.mxu0 0
        %478 = vmatmul.mubr.bf16.gmra.mrb[0].mxu0 %v284
        %v479 = vpop.f32.mrb[0].mxu0
        %v480 = vadd.f32 0.0, %v479
        %v481 = vpop.f32.mrb[0].mxu0
        %v482 = vadd.f32 0.0, %v481
        %v483 = vpop.f32.mrb[0].mxu0
        %v484 = vpop.f32.mrb[0].mxu0
        %485 = vdwg.mxu0
        %486 = vmatprep.subr.bf16.mxu0 %v384
        %487 = vmatpush1.bf16.msra.mxu0 %v383
        %488 = vmatprep.subr.bf16.mxu0 %v388
        %489 = vmatpush1.bf16.msra.mxu0 %v387
        %490 = vmatprep.subr.bf16.mxu0 %v392
        %491 = vmatpush1.bf16.msra.mxu0 %v391
        %492 = vmatprep.subr.bf16.mxu0 %v396
        %493 = vmatpush1.bf16.msra.mxu0 %v395
        %494 = vmatprep.subr.bf16.mxu0 %v400
        %495 = vmatpush1.bf16.msra.mxu0 %v399
        %496 = vmatprep.subr.bf16.mxu0 %v404
        %497 = vmatpush1.bf16.msra.mxu0 %v403
        %498 = vmatprep.subr.bf16.mxu0 %v408
        %499 = vmatpush1.bf16.msra.mxu0 %v407
        %500 = vmatprep.subr.bf16.mxu0 %v412
        %501 = vmatpush1.bf16.msra.mxu0 %v411
        %502 = vmatprep.subr.bf16.mxu0 0
        %503 = vmatpush1.bf16.msra.mxu0 0
        %504 = vmatprep.subr.bf16.mxu0 0
        %505 = vmatpush1.bf16.msra.mxu0 0
        %506 = vmatprep.subr.bf16.mxu0 0
        %507 = vmatpush1.bf16.msra.mxu0 0
        %508 = vmatprep.subr.bf16.mxu0 0
        %509 = vmatpush1.bf16.msra.mxu0 0
        %510 = vmatprep.subr.bf16.mxu0 0
        %511 = vmatpush1.bf16.msra.mxu0 0
        %512 = vmatprep.subr.bf16.mxu0 0
        %513 = vmatpush1.bf16.msra.mxu0 0
        %514 = vmatprep.subr.bf16.mxu0 0
        %515 = vmatpush1.bf16.msra.mxu0 0
        %516 = vmatprep.subr.bf16.mxu0 0
        %517 = vmatpush1.bf16.msra.mxu0 0
        %518 = vmatprep.mubr.bf16.mxu0 0
        %519 = vmatmul.mubr.bf16.gmra.mrb[0].mxu0 %v284
        %v520 = vpop.f32.mrb[0].mxu0
        %v521 = vadd.f32 0.0, %v520
        %v522 = vpop.f32.mrb[0].mxu0
        %v523 = vadd.f32 0.0, %v522
        %v524 = vpop.f32.mrb[0].mxu0
        %v525 = vpop.f32.mrb[0].mxu0
        %526 = vdwg.mxu0
        %v527 = vld [vmem:[%s237] sm:$0xff]
        %v528 = vld [vmem:[%s237 + $0x8] sm:$0xff]
        %v529 = vunpack.c.l.bf16 %v527
        %v530 = vunpack.c.h.bf16 %v527
        %v531 = vunpack.c.l.bf16 %v528
        %v532 = vunpack.c.h.bf16 %v528
        %v533 = vadd.f32 %v529, %v480
        %v534 = vadd.f32 %v530, %v482
        %v535 = vadd.f32 %v531, %v521
        %v536 = vadd.f32 %v532, %v523
        %v537 = vxor.u32 %v533, 2147483648
        %v538 = vxor.u32 %v534, 2147483648
        %v539 = vxor.u32 %v535, 2147483648
        %v540 = vmul.f32 %v537, 1.442695
        %v541 = vpow.pop %v540
        %v542 = vmul.f32 %v538, 1.442695
        %v543 = vpow.pop %v542
        %v544 = vmul.f32 %v539, 1.442695
        %v545 = vpow.pop %v544
        %v546 = vadd.f32 %v541, 1.0
        %v547 = vadd.f32 %v543, 1.0
        %v548 = vadd.f32 %v545, 1.0
        %v549 = vrcp.pop %v546
        %v550 = vmul.f32 1.0, %v549
        %v551 = vrcp.pop %v547
        %v552 = vmul.f32 1.0, %v551
        %v553 = vrcp.pop %v548
        %v554 = vmul.f32 1.0, %v553
        %v555 = vtanh.pop %v536
        %v556 = vmul.f32 %v552, %v283
        %v557 = vmul.f32 %v550, %v555
        %v558 = vadd.f32 %v556, %v557
        %v559 = vtanh.pop %v558
        %v560 = vmul.f32 %v554, %v559
        %561 = vst [vmem:[#allocation2] sm:$0xff] %v560
        %562 = vst [vmem:[#allocation3] sm:$0xff] %v558
        %563 = vst [vmem:[%s224] sm:$0xff] %v560
        %564 = vst [vmem:[%s231] sm:$0xff] %v558
        %v565 = vld [vmem:[#allocation2] sm:$0xff]
        %v566 = vld [vmem:[#allocation3] sm:$0xff]
        %v567 = vpack.c.bf16 %v565, %v565
        %568 = vmatprep.subr.bf16.mxu0 %v382
        %569 = vmatpush1.bf16.msra.mxu0 %v381
        %570 = vmatprep.subr.bf16.mxu0 %v386
        %571 = vmatpush1.bf16.msra.mxu0 %v385
        %572 = vmatprep.subr.bf16.mxu0 %v390
        %573 = vmatpush1.bf16.msra.mxu0 %v389
        %574 = vmatprep.subr.bf16.mxu0 %v394
        %575 = vmatpush1.bf16.msra.mxu0 %v393
        %576 = vmatprep.subr.bf16.mxu0 %v398
        %577 = vmatpush1.bf16.msra.mxu0 %v397
        %578 = vmatprep.subr.bf16.mxu0 %v402
        %579 = vmatpush1.bf16.msra.mxu0 %v401
        %580 = vmatprep.subr.bf16.mxu0 %v406
        %581 = vmatpush1.bf16.msra.mxu0 %v405
        %582 = vmatprep.subr.bf16.mxu0 %v410
        %583 = vmatpush1.bf16.msra.mxu0 %v409
        %584 = vmatprep.subr.bf16.mxu0 0
        %585 = vmatpush1.bf16.msra.mxu0 0
        %586 = vmatprep.subr.bf16.mxu0 0
        %587 = vmatpush1.bf16.msra.mxu0 0
        %588 = vmatprep.subr.bf16.mxu0 0
        %589 = vmatpush1.bf16.msra.mxu0 0
        %590 = vmatprep.subr.bf16.mxu0 0
        %591 = vmatpush1.bf16.msra.mxu0 0
        %592 = vmatprep.subr.bf16.mxu0 0
        %593 = vmatpush1.bf16.msra.mxu0 0
        %594 = vmatprep.subr.bf16.mxu0 0
        %595 = vmatpush1.bf16.msra.mxu0 0
        %596 = vmatprep.subr.bf16.mxu0 0
        %597 = vmatpush1.bf16.msra.mxu0 0
        %598 = vmatprep.subr.bf16.mxu0 0
        %599 = vmatpush1.bf16.msra.mxu0 0
        %600 = vmatprep.mubr.bf16.mxu0 0
        %601 = vmatmul.mubr.bf16.gmra.mrb[0].mxu0 %v567
        %v602 = vpop.f32.mrb[0].mxu0
        %v603 = vadd.f32 0.0, %v602
        %v604 = vpop.f32.mrb[0].mxu0
        %v605 = vadd.f32 0.0, %v604
        %v606 = vpop.f32.mrb[0].mxu0
        %v607 = vpop.f32.mrb[0].mxu0
        %608 = vdwg.mxu0
        %609 = vmatprep.subr.bf16.mxu0 %v384
        %610 = vmatpush1.bf16.msra.mxu0 %v383
        %611 = vmatprep.subr.bf16.mxu0 %v388
        %612 = vmatpush1.bf16.msra.mxu0 %v387
        %613 = vmatprep.subr.bf16.mxu0 %v392
        %614 = vmatpush1.bf16.msra.mxu0 %v391
        %615 = vmatprep.subr.bf16.mxu0 %v396
        %616 = vmatpush1.bf16.msra.mxu0 %v395
        %617 = vmatprep.subr.bf16.mxu0 %v400
        %618 = vmatpush1.bf16.msra.mxu0 %v399
        %619 = vmatprep.subr.bf16.mxu0 %v404
        %620 = vmatpush1.bf16.msra.mxu0 %v403
        %621 = vmatprep.subr.bf16.mxu0 %v408
        %622 = vmatpush1.bf16.msra.mxu0 %v407
        %623 = vmatprep.subr.bf16.mxu0 %v412
        %624 = vmatpush1.bf16.msra.mxu0 %v411
        %625 = vmatprep.subr.bf16.mxu0 0
        %626 = vmatpush1.bf16.msra.mxu0 0
        %627 = vmatprep.subr.bf16.mxu0 0
        %628 = vmatpush1.bf16.msra.mxu0 0
        %629 = vmatprep.subr.bf16.mxu0 0
        %630 = vmatpush1.bf16.msra.mxu0 0
        %631 = vmatprep.subr.bf16.mxu0 0
        %632 = vmatpush1.bf16.msra.mxu0 0
        %633 = vmatprep.subr.bf16.mxu0 0
        %634 = vmatpush1.bf16.msra.mxu0 0
        %635 = vmatprep.subr.bf16.mxu0 0
        %636 = vmatpush1.bf16.msra.mxu0 0
        %637 = vmatprep.subr.bf16.mxu0 0
        %638 = vmatpush1.bf16.msra.mxu0 0
        %639 = vmatprep.subr.bf16.mxu0 0
        %640 = vmatpush1.bf16.msra.mxu0 0
        %641 = vmatprep.mubr.bf16.mxu0 0
        %642 = vmatmul.mubr.bf16.gmra.mrb[0].mxu0 %v567
        %v643 = vpop.f32.mrb[0].mxu0
        %v644 = vadd.f32 0.0, %v643
        %v645 = vpop.f32.mrb[0].mxu0
        %v646 = vadd.f32 0.0, %v645
        %v647 = vpop.f32.mrb[0].mxu0
        %v648 = vpop.f32.mrb[0].mxu0
        %649 = vdwg.mxu0
        %s650 = scalar_lea.vmem %s237, 16
        %v651 = vld [vmem:[%s650] sm:$0xff]
        %v652 = vld [vmem:[%s650 + $0x8] sm:$0xff]
        %v653 = vunpack.c.l.bf16 %v651
        %v654 = vunpack.c.h.bf16 %v651
        %v655 = vunpack.c.l.bf16 %v652
        %v656 = vunpack.c.h.bf16 %v652
        %v657 = vadd.f32 %v653, %v603
        %v658 = vadd.f32 %v654, %v605
        %v659 = vadd.f32 %v655, %v644
        %v660 = vadd.f32 %v656, %v646
        %v661 = vxor.u32 %v657, 2147483648
        %v662 = vxor.u32 %v658, 2147483648
        %v663 = vxor.u32 %v659, 2147483648
        %v664 = vmul.f32 %v661, 1.442695
        %v665 = vpow.pop %v664
        %v666 = vmul.f32 %v662, 1.442695
        %v667 = vpow.pop %v666
        %v668 = vmul.f32 %v663, 1.442695
        %v669 = vpow.pop %v668
        %v670 = vadd.f32 %v665, 1.0
        %v671 = vadd.f32 %v667, 1.0
        %v672 = vadd.f32 %v669, 1.0
        %v673 = vrcp.pop %v670
        %v674 = vmul.f32 1.0, %v673
        %v675 = vrcp.pop %v671
        %v676 = vmul.f32 1.0, %v675
        %v677 = vrcp.pop %v672
        %v678 = vmul.f32 1.0, %v677
        %v679 = vtanh.pop %v660
        %v680 = vmul.f32 %v676, %v566
        %v681 = vmul.f32 %v674, %v679
        %v682 = vadd.f32 %v680, %v681
        %v683 = vtanh.pop %v682
        %v684 = vmul.f32 %v678, %v683
        %685 = vst [vmem:[#allocation2] sm:$0xff] %v684
        %686 = vst [vmem:[#allocation3] sm:$0xff] %v682
        %s687 = scalar_lea.vmem %s224, 8 [#allocation4]
        %688 = vst [vmem:[%s687] sm:$0xff] %v684
        %s689 = scalar_lea.vmem %s231, 8 [#allocation6]
        %690 = vst [vmem:[%s689] sm:$0xff] %v682
        %v691 = vld [vmem:[#allocation2] sm:$0xff]
        %v692 = vld [vmem:[#allocation3] sm:$0xff]
        %v693 = vpack.c.bf16 %v691, %v691
        %694 = vmatprep.subr.bf16.mxu0 %v382
        %695 = vmatpush1.bf16.msra.mxu0 %v381
        %696 = vmatprep.subr.bf16.mxu0 %v386
        %697 = vmatpush1.bf16.msra.mxu0 %v385
        %698 = vmatprep.subr.bf16.mxu0 %v390
        %699 = vmatpush1.bf16.msra.mxu0 %v389
        %700 = vmatprep.subr.bf16.mxu0 %v394
        %701 = vmatpush1.bf16.msra.mxu0 %v393
        %702 = vmatprep.subr.bf16.mxu0 %v398
        %703 = vmatpush1.bf16.msra.mxu0 %v397
        %704 = vmatprep.subr.bf16.mxu0 %v402
        %705 = vmatpush1.bf16.msra.mxu0 %v401
        %706 = vmatprep.subr.bf16.mxu0 %v406
        %707 = vmatpush1.bf16.msra.mxu0 %v405
        %708 = vmatprep.subr.bf16.mxu0 %v410
        %709 = vmatpush1.bf16.msra.mxu0 %v409
        %710 = vmatprep.subr.bf16.mxu0 0
        %711 = vmatpush1.bf16.msra.mxu0 0
        %712 = vmatprep.subr.bf16.mxu0 0
        %713 = vmatpush1.bf16.msra.mxu0 0
        %714 = vmatprep.subr.bf16.mxu0 0
        %715 = vmatpush1.bf16.msra.mxu0 0
        %716 = vmatprep.subr.bf16.mxu0 0
        %717 = vmatpush1.bf16.msra.mxu0 0
        %718 = vmatprep.subr.bf16.mxu0 0
        %719 = vmatpush1.bf16.msra.mxu0 0
        %720 = vmatprep.subr.bf16.mxu0 0
        %721 = vmatpush1.bf16.msra.mxu0 0
        %722 = vmatprep.subr.bf16.mxu0 0
        %723 = vmatpush1.bf16.msra.mxu0 0
        %724 = vmatprep.subr.bf16.mxu0 0
        %725 = vmatpush1.bf16.msra.mxu0 0
        %726 = vmatprep.mubr.bf16.mxu0 0
        %727 = vmatmul.mubr.bf16.gmra.mrb[0].mxu0 %v693
        %v728 = vpop.f32.mrb[0].mxu0
        %v729 = vadd.f32 0.0, %v728
        %v730 = vpop.f32.mrb[0].mxu0
        %v731 = vadd.f32 0.0, %v730
        %v732 = vpop.f32.mrb[0].mxu0
        %v733 = vpop.f32.mrb[0].mxu0
        %734 = vdwg.mxu0
        %735 = vmatprep.subr.bf16.mxu0 %v384
        %736 = vmatpush1.bf16.msra.mxu0 %v383
        %737 = vmatprep.subr.bf16.mxu0 %v388
        %738 = vmatpush1.bf16.msra.mxu0 %v387
        %739 = vmatprep.subr.bf16.mxu0 %v392
        %740 = vmatpush1.bf16.msra.mxu0 %v391
        %741 = vmatprep.subr.bf16.mxu0 %v396
        %742 = vmatpush1.bf16.msra.mxu0 %v395
        %743 = vmatprep.subr.bf16.mxu0 %v400
        %744 = vmatpush1.bf16.msra.mxu0 %v399
        %745 = vmatprep.subr.bf16.mxu0 %v404
        %746 = vmatpush1.bf16.msra.mxu0 %v403
        %747 = vmatprep.subr.bf16.mxu0 %v408
        %748 = vmatpush1.bf16.msra.mxu0 %v407
        %749 = vmatprep.subr.bf16.mxu0 %v412
        %750 = vmatpush1.bf16.msra.mxu0 %v411
        %751 = vmatprep.subr.bf16.mxu0 0
        %752 = vmatpush1.bf16.msra.mxu0 0
        %753 = vmatprep.subr.bf16.mxu0 0
        %754 = vmatpush1.bf16.msra.mxu0 0
        %755 = vmatprep.subr.bf16.mxu0 0
        %756 = vmatpush1.bf16.msra.mxu0 0
        %757 = vmatprep.subr.bf16.mxu0 0
        %758 = vmatpush1.bf16.msra.mxu0 0
        %759 = vmatprep.subr.bf16.mxu0 0
        %760 = vmatpush1.bf16.msra.mxu0 0
        %761 = vmatprep.subr.bf16.mxu0 0
        %762 = vmatpush1.bf16.msra.mxu0 0
        %763 = vmatprep.subr.bf16.mxu0 0
        %764 = vmatpush1.bf16.msra.mxu0 0
        %765 = vmatprep.subr.bf16.mxu0 0
        %766 = vmatpush1.bf16.msra.mxu0 0
        %767 = vmatprep.mubr.bf16.mxu0 0
        %768 = vmatmul.mubr.bf16.gmra.mrb[0].mxu0 %v693
        %v769 = vpop.f32.mrb[0].mxu0
        %v770 = vadd.f32 0.0, %v769
        %v771 = vpop.f32.mrb[0].mxu0
        %v772 = vadd.f32 0.0, %v771
        %v773 = vpop.f32.mrb[0].mxu0
        %v774 = vpop.f32.mrb[0].mxu0
        %775 = vdwg.mxu0
        %s776 = scalar_lea.vmem %s237, 32
        %v777 = vld [vmem:[%s776] sm:$0xff]
        %v778 = vld [vmem:[%s776 + $0x8] sm:$0xff]
        %v779 = vunpack.c.l.bf16 %v777
        %v780 = vunpack.c.h.bf16 %v777
        %v781 = vunpack.c.l.bf16 %v778
        %v782 = vunpack.c.h.bf16 %v778
        %v783 = vadd.f32 %v779, %v729
        %v784 = vadd.f32 %v780, %v731
        %v785 = vadd.f32 %v781, %v770
        %v786 = vadd.f32 %v782, %v772
        %v787 = vxor.u32 %v783, 2147483648
        %v788 = vxor.u32 %v784, 2147483648
        %v789 = vxor.u32 %v785, 2147483648
        %v790 = vmul.f32 %v787, 1.442695
        %v791 = vpow.pop %v790
        %v792 = vmul.f32 %v788, 1.442695
        %v793 = vpow.pop %v792
        %v794 = vmul.f32 %v789, 1.442695
        %v795 = vpow.pop %v794
        %v796 = vadd.f32 %v791, 1.0
        %v797 = vadd.f32 %v793, 1.0
        %v798 = vadd.f32 %v795, 1.0
        %v799 = vrcp.pop %v796
        %v800 = vmul.f32 1.0, %v799
        %v801 = vrcp.pop %v797
        %v802 = vmul.f32 1.0, %v801
        %v803 = vrcp.pop %v798
        %v804 = vmul.f32 1.0, %v803
        %v805 = vtanh.pop %v786
        %v806 = vmul.f32 %v802, %v692
        %v807 = vmul.f32 %v800, %v805
        %v808 = vadd.f32 %v806, %v807
        %v809 = vtanh.pop %v808
        %v810 = vmul.f32 %v804, %v809
        %811 = vst [vmem:[#allocation2] sm:$0xff] %v810
        %812 = vst [vmem:[#allocation3] sm:$0xff] %v808
        %s813 = scalar_lea.vmem %s224, 16 [#allocation4]
        %814 = vst [vmem:[%s813] sm:$0xff] %v810
        %s815 = scalar_lea.vmem %s231, 16 [#allocation6]
        %816 = vst [vmem:[%s815] sm:$0xff] %v808
        %v817 = vld [vmem:[#allocation2] sm:$0xff]
        %v818 = vld [vmem:[#allocation3] sm:$0xff]
        %v819 = vpack.c.bf16 %v817, %v817
        %820 = vmatprep.subr.bf16.mxu0 %v382
        %821 = vmatpush1.bf16.msra.mxu0 %v381
        %822 = vmatprep.subr.bf16.mxu0 %v386
        %823 = vmatpush1.bf16.msra.mxu0 %v385
        %824 = vmatprep.subr.bf16.mxu0 %v390
        %825 = vmatpush1.bf16.msra.mxu0 %v389
        %826 = vmatprep.subr.bf16.mxu0 %v394
        %827 = vmatpush1.bf16.msra.mxu0 %v393
        %828 = vmatprep.subr.bf16.mxu0 %v398
        %829 = vmatpush1.bf16.msra.mxu0 %v397
        %830 = vmatprep.subr.bf16.mxu0 %v402
        %831 = vmatpush1.bf16.msra.mxu0 %v401
        %832 = vmatprep.subr.bf16.mxu0 %v406
        %833 = vmatpush1.bf16.msra.mxu0 %v405
        %834 = vmatprep.subr.bf16.mxu0 %v410
        %835 = vmatpush1.bf16.msra.mxu0 %v409
        %836 = vmatprep.subr.bf16.mxu0 0
        %837 = vmatpush1.bf16.msra.mxu0 0
        %838 = vmatprep.subr.bf16.mxu0 0
        %839 = vmatpush1.bf16.msra.mxu0 0
        %840 = vmatprep.subr.bf16.mxu0 0
        %841 = vmatpush1.bf16.msra.mxu0 0
        %842 = vmatprep.subr.bf16.mxu0 0
        %843 = vmatpush1.bf16.msra.mxu0 0
        %844 = vmatprep.subr.bf16.mxu0 0
        %845 = vmatpush1.bf16.msra.mxu0 0
        %846 = vmatprep.subr.bf16.mxu0 0
        %847 = vmatpush1.bf16.msra.mxu0 0
        %848 = vmatprep.subr.bf16.mxu0 0
        %849 = vmatpush1.bf16.msra.mxu0 0
        %850 = vmatprep.subr.bf16.mxu0 0
        %851 = vmatpush1.bf16.msra.mxu0 0
        %852 = vmatprep.mubr.bf16.mxu0 0
        %853 = vmatmul.mubr.bf16.gmra.mrb[0].mxu0 %v819
        %v854 = vpop.f32.mrb[0].mxu0
        %v855 = vadd.f32 0.0, %v854
        %v856 = vpop.f32.mrb[0].mxu0
        %v857 = vadd.f32 0.0, %v856
        %v858 = vpop.f32.mrb[0].mxu0
        %v859 = vpop.f32.mrb[0].mxu0
        %860 = vdwg.mxu0
        %861 = vmatprep.subr.bf16.mxu0 %v384
        %862 = vmatpush1.bf16.msra.mxu0 %v383
        %863 = vmatprep.subr.bf16.mxu0 %v388
        %864 = vmatpush1.bf16.msra.mxu0 %v387
        %865 = vmatprep.subr.bf16.mxu0 %v392
        %866 = vmatpush1.bf16.msra.mxu0 %v391
        %867 = vmatprep.subr.bf16.mxu0 %v396
        %868 = vmatpush1.bf16.msra.mxu0 %v395
        %869 = vmatprep.subr.bf16.mxu0 %v400
        %870 = vmatpush1.bf16.msra.mxu0 %v399
        %871 = vmatprep.subr.bf16.mxu0 %v404
        %872 = vmatpush1.bf16.msra.mxu0 %v403
        %873 = vmatprep.subr.bf16.mxu0 %v408
        %874 = vmatpush1.bf16.msra.mxu0 %v407
        %875 = vmatprep.subr.bf16.mxu0 %v412
        %876 = vmatpush1.bf16.msra.mxu0 %v411
        %877 = vmatprep.subr.bf16.mxu0 0
        %878 = vmatpush1.bf16.msra.mxu0 0
        %879 = vmatprep.subr.bf16.mxu0 0
        %880 = vmatpush1.bf16.msra.mxu0 0
        %881 = vmatprep.subr.bf16.mxu0 0
        %882 = vmatpush1.bf16.msra.mxu0 0
        %883 = vmatprep.subr.bf16.mxu0 0
        %884 = vmatpush1.bf16.msra.mxu0 0
        %885 = vmatprep.subr.bf16.mxu0 0
        %886 = vmatpush1.bf16.msra.mxu0 0
        %887 = vmatprep.subr.bf16.mxu0 0
        %888 = vmatpush1.bf16.msra.mxu0 0
        %889 = vmatprep.subr.bf16.mxu0 0
        %890 = vmatpush1.bf16.msra.mxu0 0
        %891 = vmatprep.subr.bf16.mxu0 0
        %892 = vmatpush1.bf16.msra.mxu0 0
        %893 = vmatprep.mubr.bf16.mxu0 0
        %894 = vmatmul.mubr.bf16.gmra.mrb[0].mxu0 %v819
        %v895 = vpop.f32.mrb[0].mxu0
        %v896 = vadd.f32 0.0, %v895
        %v897 = vpop.f32.mrb[0].mxu0
        %v898 = vadd.f32 0.0, %v897
        %v899 = vpop.f32.mrb[0].mxu0
        %v900 = vpop.f32.mrb[0].mxu0
        %901 = vdwg.mxu0
        %s902 = scalar_lea.vmem %s237, 48
        %v903 = vld [vmem:[%s902] sm:$0xff]
        %v904 = vld [vmem:[%s902 + $0x8] sm:$0xff]
        %v905 = vunpack.c.l.bf16 %v903
        %v906 = vunpack.c.h.bf16 %v903
        %v907 = vunpack.c.l.bf16 %v904
        %v908 = vunpack.c.h.bf16 %v904
        %v909 = vadd.f32 %v905, %v855
        %v910 = vadd.f32 %v906, %v857
        %v911 = vadd.f32 %v907, %v896
        %v912 = vadd.f32 %v908, %v898
        %v913 = vxor.u32 %v909, 2147483648
        %v914 = vxor.u32 %v910, 2147483648
        %v915 = vxor.u32 %v911, 2147483648
        %v916 = vmul.f32 %v913, 1.442695
        %v917 = vpow.pop %v916
        %v918 = vmul.f32 %v914, 1.442695
        %v919 = vpow.pop %v918
        %v920 = vmul.f32 %v915, 1.442695
        %v921 = vpow.pop %v920
        %v922 = vadd.f32 %v917, 1.0
        %v923 = vadd.f32 %v919, 1.0
        %v924 = vadd.f32 %v921, 1.0
        %v925 = vrcp.pop %v922
        %v926 = vmul.f32 1.0, %v925
        %v927 = vrcp.pop %v923
        %v928 = vmul.f32 1.0, %v927
        %v929 = vrcp.pop %v924
        %v930 = vmul.f32 1.0, %v929
        %v931 = vtanh.pop %v912
        %v932 = vmul.f32 %v928, %v818
        %v933 = vmul.f32 %v926, %v931
        %v934 = vadd.f32 %v932, %v933
        %v935 = vtanh.pop %v934
        %v936 = vmul.f32 %v930, %v935
        %937 = vst [vmem:[#allocation2] sm:$0xff] %v936
        %938 = vst [vmem:[#allocation3] sm:$0xff] %v934
        %s939 = scalar_lea.vmem %s224, 24 [#allocation4]
        %940 = vst [vmem:[%s939] sm:$0xff] %v936
        %s941 = scalar_lea.vmem %s231, 24 [#allocation6]
        %942 = vst [vmem:[%s941] sm:$0xff] %v934
        %v943 = vld [vmem:[#allocation2] sm:$0xff]
        %v944 = vld [vmem:[#allocation3] sm:$0xff]
        %v945 = vpack.c.bf16 %v943, %v943
        %946 = vmatprep.subr.bf16.mxu0 %v382
        %947 = vmatpush1.bf16.msra.mxu0 %v381
        %948 = vmatprep.subr.bf16.mxu0 %v386
        %949 = vmatpush1.bf16.msra.mxu0 %v385
        %950 = vmatprep.subr.bf16.mxu0 %v390
        %951 = vmatpush1.bf16.msra.mxu0 %v389
        %952 = vmatprep.subr.bf16.mxu0 %v394
        %953 = vmatpush1.bf16.msra.mxu0 %v393
        %954 = vmatprep.subr.bf16.mxu0 %v398
        %955 = vmatpush1.bf16.msra.mxu0 %v397
        %956 = vmatprep.subr.bf16.mxu0 %v402
        %957 = vmatpush1.bf16.msra.mxu0 %v401
        %958 = vmatprep.subr.bf16.mxu0 %v406
        %959 = vmatpush1.bf16.msra.mxu0 %v405
        %960 = vmatprep.subr.bf16.mxu0 %v410
        %961 = vmatpush1.bf16.msra.mxu0 %v409
        %962 = vmatprep.subr.bf16.mxu0 0
        %963 = vmatpush1.bf16.msra.mxu0 0
        %964 = vmatprep.subr.bf16.mxu0 0
        %965 = vmatpush1.bf16.msra.mxu0 0
        %966 = vmatprep.subr.bf16.mxu0 0
        %967 = vmatpush1.bf16.msra.mxu0 0
        %968 = vmatprep.subr.bf16.mxu0 0
        %969 = vmatpush1.bf16.msra.mxu0 0
        %970 = vmatprep.subr.bf16.mxu0 0
        %971 = vmatpush1.bf16.msra.mxu0 0
        %972 = vmatprep.subr.bf16.mxu0 0
        %973 = vmatpush1.bf16.msra.mxu0 0
        %974 = vmatprep.subr.bf16.mxu0 0
        %975 = vmatpush1.bf16.msra.mxu0 0
        %976 = vmatprep.subr.bf16.mxu0 0
        %977 = vmatpush1.bf16.msra.mxu0 0
        %978 = vmatprep.mubr.bf16.mxu0 0
        %979 = vmatmul.mubr.bf16.gmra.mrb[0].mxu0 %v945
        %v980 = vpop.f32.mrb[0].mxu0
        %v981 = vadd.f32 0.0, %v980
        %v982 = vpop.f32.mrb[0].mxu0
        %v983 = vadd.f32 0.0, %v982
        %v984 = vpop.f32.mrb[0].mxu0
        %v985 = vpop.f32.mrb[0].mxu0
        %986 = vdwg.mxu0
        %987 = vmatprep.subr.bf16.mxu0 %v384
        %988 = vmatpush1.bf16.msra.mxu0 %v383
        %989 = vmatprep.subr.bf16.mxu0 %v388
        %990 = vmatpush1.bf16.msra.mxu0 %v387
        %991 = vmatprep.subr.bf16.mxu0 %v392
        %992 = vmatpush1.bf16.msra.mxu0 %v391
        %993 = vmatprep.subr.bf16.mxu0 %v396
        %994 = vmatpush1.bf16.msra.mxu0 %v395
        %995 = vmatprep.subr.bf16.mxu0 %v400
        %996 = vmatpush1.bf16.msra.mxu0 %v399
        %997 = vmatprep.subr.bf16.mxu0 %v404
        %998 = vmatpush1.bf16.msra.mxu0 %v403
        %999 = vmatprep.subr.bf16.mxu0 %v408
        %1000 = vmatpush1.bf16.msra.mxu0 %v407
        %1001 = vmatprep.subr.bf16.mxu0 %v412
        %1002 = vmatpush1.bf16.msra.mxu0 %v411
        %1003 = vmatprep.subr.bf16.mxu0 0
        %1004 = vmatpush1.bf16.msra.mxu0 0
        %1005 = vmatprep.subr.bf16.mxu0 0
        %1006 = vmatpush1.bf16.msra.mxu0 0
        %1007 = vmatprep.subr.bf16.mxu0 0
        %1008 = vmatpush1.bf16.msra.mxu0 0
        %1009 = vmatprep.subr.bf16.mxu0 0
        %1010 = vmatpush1.bf16.msra.mxu0 0
        %1011 = vmatprep.subr.bf16.mxu0 0
        %1012 = vmatpush1.bf16.msra.mxu0 0
        %1013 = vmatprep.subr.bf16.mxu0 0
        %1014 = vmatpush1.bf16.msra.mxu0 0
        %1015 = vmatprep.subr.bf16.mxu0 0
        %1016 = vmatpush1.bf16.msra.mxu0 0
        %1017 = vmatprep.subr.bf16.mxu0 0
        %1018 = vmatpush1.bf16.msra.mxu0 0
        %1019 = vmatprep.mubr.bf16.mxu0 0
        %1020 = vmatmul.mubr.bf16.gmra.mrb[0].mxu0 %v945
        %v1021 = vpop.f32.mrb[0].mxu0
        %v1022 = vadd.f32 0.0, %v1021
        %v1023 = vpop.f32.mrb[0].mxu0
        %v1024 = vadd.f32 0.0, %v1023
        %v1025 = vpop.f32.mrb[0].mxu0
        %v1026 = vpop.f32.mrb[0].mxu0
        %1027 = vdwg.mxu0
        %s1028 = scalar_lea.vmem %s237, 64
        %v1029 = vld [vmem:[%s1028] sm:$0xff]
        %v1030 = vld [vmem:[%s1028 + $0x8] sm:$0xff]
        %v1031 = vunpack.c.l.bf16 %v1029
        %v1032 = vunpack.c.h.bf16 %v1029
        %v1033 = vunpack.c.l.bf16 %v1030
        %v1034 = vunpack.c.h.bf16 %v1030
        %v1035 = vadd.f32 %v1031, %v981
        %v1036 = vadd.f32 %v1032, %v983
        %v1037 = vadd.f32 %v1033, %v1022
        %v1038 = vadd.f32 %v1034, %v1024
        %v1039 = vxor.u32 %v1035, 2147483648
        %v1040 = vxor.u32 %v1036, 2147483648
        %v1041 = vxor.u32 %v1037, 2147483648
        %v1042 = vmul.f32 %v1039, 1.442695
        %v1043 = vpow.pop %v1042
        %v1044 = vmul.f32 %v1040, 1.442695
        %v1045 = vpow.pop %v1044
        %v1046 = vmul.f32 %v1041, 1.442695
        %v1047 = vpow.pop %v1046
        %v1048 = vadd.f32 %v1043, 1.0
        %v1049 = vadd.f32 %v1045, 1.0
        %v1050 = vadd.f32 %v1047, 1.0
        %v1051 = vrcp.pop %v1048
        %v1052 = vmul.f32 1.0, %v1051
        %v1053 = vrcp.pop %v1049
        %v1054 = vmul.f32 1.0, %v1053
        %v1055 = vrcp.pop %v1050
        %v1056 = vmul.f32 1.0, %v1055
        %v1057 = vtanh.pop %v1038
        %v1058 = vmul.f32 %v1054, %v944
        %v1059 = vmul.f32 %v1052, %v1057
        %v1060 = vadd.f32 %v1058, %v1059
        %v1061 = vtanh.pop %v1060
        %v1062 = vmul.f32 %v1056, %v1061
        %1063 = vst [vmem:[#allocation2] sm:$0xff] %v1062
        %1064 = vst [vmem:[#allocation3] sm:$0xff] %v1060
        %s1065 = scalar_lea.vmem %s224, 32 [#allocation4]
        %1066 = vst [vmem:[%s1065] sm:$0xff] %v1062
        %s1067 = scalar_lea.vmem %s231, 32 [#allocation6]
        %1068 = vst [vmem:[%s1067] sm:$0xff] %v1060
        %v1069 = vld [vmem:[#allocation2] sm:$0xff]
        %v1070 = vld [vmem:[#allocation3] sm:$0xff]
        %v1071 = vpack.c.bf16 %v1069, %v1069
        %1072 = vmatprep.subr.bf16.mxu0 %v382
        %1073 = vmatpush1.bf16.msra.mxu0 %v381
        %1074 = vmatprep.subr.bf16.mxu0 %v386
        %1075 = vmatpush1.bf16.msra.mxu0 %v385
        %1076 = vmatprep.subr.bf16.mxu0 %v390
        %1077 = vmatpush1.bf16.msra.mxu0 %v389
        %1078 = vmatprep.subr.bf16.mxu0 %v394
        %1079 = vmatpush1.bf16.msra.mxu0 %v393
        %1080 = vmatprep.subr.bf16.mxu0 %v398
        %1081 = vmatpush1.bf16.msra.mxu0 %v397
        %1082 = vmatprep.subr.bf16.mxu0 %v402
        %1083 = vmatpush1.bf16.msra.mxu0 %v401
        %1084 = vmatprep.subr.bf16.mxu0 %v406
        %1085 = vmatpush1.bf16.msra.mxu0 %v405
        %1086 = vmatprep.subr.bf16.mxu0 %v410
        %1087 = vmatpush1.bf16.msra.mxu0 %v409
        %1088 = vmatprep.subr.bf16.mxu0 0
        %1089 = vmatpush1.bf16.msra.mxu0 0
        %1090 = vmatprep.subr.bf16.mxu0 0
        %1091 = vmatpush1.bf16.msra.mxu0 0
        %1092 = vmatprep.subr.bf16.mxu0 0
        %1093 = vmatpush1.bf16.msra.mxu0 0
        %1094 = vmatprep.subr.bf16.mxu0 0
        %1095 = vmatpush1.bf16.msra.mxu0 0
        %1096 = vmatprep.subr.bf16.mxu0 0
        %1097 = vmatpush1.bf16.msra.mxu0 0
        %1098 = vmatprep.subr.bf16.mxu0 0
        %1099 = vmatpush1.bf16.msra.mxu0 0
        %1100 = vmatprep.subr.bf16.mxu0 0
        %1101 = vmatpush1.bf16.msra.mxu0 0
        %1102 = vmatprep.subr.bf16.mxu0 0
        %1103 = vmatpush1.bf16.msra.mxu0 0
        %1104 = vmatprep.mubr.bf16.mxu0 0
        %1105 = vmatmul.mubr.bf16.gmra.mrb[0].mxu0 %v1071
        %v1106 = vpop.f32.mrb[0].mxu0
        %v1107 = vadd.f32 0.0, %v1106
        %v1108 = vpop.f32.mrb[0].mxu0
        %v1109 = vadd.f32 0.0, %v1108
        %v1110 = vpop.f32.mrb[0].mxu0
        %v1111 = vpop.f32.mrb[0].mxu0
        %1112 = vdwg.mxu0
        %1113 = vmatprep.subr.bf16.mxu0 %v384
        %1114 = vmatpush1.bf16.msra.mxu0 %v383
        %1115 = vmatprep.subr.bf16.mxu0 %v388
        %1116 = vmatpush1.bf16.msra.mxu0 %v387
        %1117 = vmatprep.subr.bf16.mxu0 %v392
        %1118 = vmatpush1.bf16.msra.mxu0 %v391
        %1119 = vmatprep.subr.bf16.mxu0 %v396
        %1120 = vmatpush1.bf16.msra.mxu0 %v395
        %1121 = vmatprep.subr.bf16.mxu0 %v400
        %1122 = vmatpush1.bf16.msra.mxu0 %v399
        %1123 = vmatprep.subr.bf16.mxu0 %v404
        %1124 = vmatpush1.bf16.msra.mxu0 %v403
        %1125 = vmatprep.subr.bf16.mxu0 %v408
        %1126 = vmatpush1.bf16.msra.mxu0 %v407
        %1127 = vmatprep.subr.bf16.mxu0 %v412
        %1128 = vmatpush1.bf16.msra.mxu0 %v411
        %1129 = vmatprep.subr.bf16.mxu0 0
        %1130 = vmatpush1.bf16.msra.mxu0 0
        %1131 = vmatprep.subr.bf16.mxu0 0
        %1132 = vmatpush1.bf16.msra.mxu0 0
        %1133 = vmatprep.subr.bf16.mxu0 0
        %1134 = vmatpush1.bf16.msra.mxu0 0
        %1135 = vmatprep.subr.bf16.mxu0 0
        %1136 = vmatpush1.bf16.msra.mxu0 0
        %1137 = vmatprep.subr.bf16.mxu0 0
        %1138 = vmatpush1.bf16.msra.mxu0 0
        %1139 = vmatprep.subr.bf16.mxu0 0
        %1140 = vmatpush1.bf16.msra.mxu0 0
        %1141 = vmatprep.subr.bf16.mxu0 0
        %1142 = vmatpush1.bf16.msra.mxu0 0
        %1143 = vmatprep.subr.bf16.mxu0 0
        %1144 = vmatpush1.bf16.msra.mxu0 0
        %1145 = vmatprep.mubr.bf16.mxu0 0
        %1146 = vmatmul.mubr.bf16.gmra.mrb[0].mxu0 %v1071
        %v1147 = vpop.f32.mrb[0].mxu0
        %v1148 = vadd.f32 0.0, %v1147
        %v1149 = vpop.f32.mrb[0].mxu0
        %v1150 = vadd.f32 0.0, %v1149
        %v1151 = vpop.f32.mrb[0].mxu0
        %v1152 = vpop.f32.mrb[0].mxu0
        %1153 = vdwg.mxu0
        %s1154 = scalar_lea.vmem %s237, 80
        %v1155 = vld [vmem:[%s1154] sm:$0xff]
        %v1156 = vld [vmem:[%s1154 + $0x8] sm:$0xff]
        %v1157 = vunpack.c.l.bf16 %v1155
        %v1158 = vunpack.c.h.bf16 %v1155
        %v1159 = vunpack.c.l.bf16 %v1156
        %v1160 = vunpack.c.h.bf16 %v1156
        %v1161 = vadd.f32 %v1157, %v1107
        %v1162 = vadd.f32 %v1158, %v1109
        %v1163 = vadd.f32 %v1159, %v1148
        %v1164 = vadd.f32 %v1160, %v1150
        %v1165 = vxor.u32 %v1161, 2147483648
        %v1166 = vxor.u32 %v1162, 2147483648
        %v1167 = vxor.u32 %v1163, 2147483648
        %v1168 = vmul.f32 %v1165, 1.442695
        %v1169 = vpow.pop %v1168
        %v1170 = vmul.f32 %v1166, 1.442695
        %v1171 = vpow.pop %v1170
        %v1172 = vmul.f32 %v1167, 1.442695
        %v1173 = vpow.pop %v1172
        %v1174 = vadd.f32 %v1169, 1.0
        %v1175 = vadd.f32 %v1171, 1.0
        %v1176 = vadd.f32 %v1173, 1.0
        %v1177 = vrcp.pop %v1174
        %v1178 = vmul.f32 1.0, %v1177
        %v1179 = vrcp.pop %v1175
        %v1180 = vmul.f32 1.0, %v1179
        %v1181 = vrcp.pop %v1176
        %v1182 = vmul.f32 1.0, %v1181
        %v1183 = vtanh.pop %v1164
        %v1184 = vmul.f32 %v1180, %v1070
        %v1185 = vmul.f32 %v1178, %v1183
        %v1186 = vadd.f32 %v1184, %v1185
        %v1187 = vtanh.pop %v1186
        %v1188 = vmul.f32 %v1182, %v1187
        %1189 = vst [vmem:[#allocation2] sm:$0xff] %v1188
        %1190 = vst [vmem:[#allocation3] sm:$0xff] %v1186
        %s1191 = scalar_lea.vmem %s224, 40 [#allocation4]
        %1192 = vst [vmem:[%s1191] sm:$0xff] %v1188
        %s1193 = scalar_lea.vmem %s231, 40 [#allocation6]
        %1194 = vst [vmem:[%s1193] sm:$0xff] %v1186
        %v1195 = vld [vmem:[#allocation2] sm:$0xff]
        %v1196 = vld [vmem:[#allocation3] sm:$0xff]
        %v1197 = vpack.c.bf16 %v1195, %v1195
        %1198 = vmatprep.subr.bf16.mxu0 %v382
        %1199 = vmatpush1.bf16.msra.mxu0 %v381
        %1200 = vmatprep.subr.bf16.mxu0 %v386
        %1201 = vmatpush1.bf16.msra.mxu0 %v385
        %1202 = vmatprep.subr.bf16.mxu0 %v390
        %1203 = vmatpush1.bf16.msra.mxu0 %v389
        %1204 = vmatprep.subr.bf16.mxu0 %v394
        %1205 = vmatpush1.bf16.msra.mxu0 %v393
        %1206 = vmatprep.subr.bf16.mxu0 %v398
        %1207 = vmatpush1.bf16.msra.mxu0 %v397
        %1208 = vmatprep.subr.bf16.mxu0 %v402
        %1209 = vmatpush1.bf16.msra.mxu0 %v401
        %1210 = vmatprep.subr.bf16.mxu0 %v406
        %1211 = vmatpush1.bf16.msra.mxu0 %v405
        %1212 = vmatprep.subr.bf16.mxu0 %v410
        %1213 = vmatpush1.bf16.msra.mxu0 %v409
        %1214 = vmatprep.subr.bf16.mxu0 0
        %1215 = vmatpush1.bf16.msra.mxu0 0
        %1216 = vmatprep.subr.bf16.mxu0 0
        %1217 = vmatpush1.bf16.msra.mxu0 0
        %1218 = vmatprep.subr.bf16.mxu0 0
        %1219 = vmatpush1.bf16.msra.mxu0 0
        %1220 = vmatprep.subr.bf16.mxu0 0
        %1221 = vmatpush1.bf16.msra.mxu0 0
        %1222 = vmatprep.subr.bf16.mxu0 0
        %1223 = vmatpush1.bf16.msra.mxu0 0
        %1224 = vmatprep.subr.bf16.mxu0 0
        %1225 = vmatpush1.bf16.msra.mxu0 0
        %1226 = vmatprep.subr.bf16.mxu0 0
        %1227 = vmatpush1.bf16.msra.mxu0 0
        %1228 = vmatprep.subr.bf16.mxu0 0
        %1229 = vmatpush1.bf16.msra.mxu0 0
        %1230 = vmatprep.mubr.bf16.mxu0 0
        %1231 = vmatmul.mubr.bf16.gmra.mrb[0].mxu0 %v1197
        %v1232 = vpop.f32.mrb[0].mxu0
        %v1233 = vadd.f32 0.0, %v1232
        %v1234 = vpop.f32.mrb[0].mxu0
        %v1235 = vadd.f32 0.0, %v1234
        %v1236 = vpop.f32.mrb[0].mxu0
        %v1237 = vpop.f32.mrb[0].mxu0
        %1238 = vdwg.mxu0
        %1239 = vmatprep.subr.bf16.mxu0 %v384
        %1240 = vmatpush1.bf16.msra.mxu0 %v383
        %1241 = vmatprep.subr.bf16.mxu0 %v388
        %1242 = vmatpush1.bf16.msra.mxu0 %v387
        %1243 = vmatprep.subr.bf16.mxu0 %v392
        %1244 = vmatpush1.bf16.msra.mxu0 %v391
        %1245 = vmatprep.subr.bf16.mxu0 %v396
        %1246 = vmatpush1.bf16.msra.mxu0 %v395
        %1247 = vmatprep.subr.bf16.mxu0 %v400
        %1248 = vmatpush1.bf16.msra.mxu0 %v399
        %1249 = vmatprep.subr.bf16.mxu0 %v404
        %1250 = vmatpush1.bf16.msra.mxu0 %v403
        %1251 = vmatprep.subr.bf16.mxu0 %v408
        %1252 = vmatpush1.bf16.msra.mxu0 %v407
        %1253 = vmatprep.subr.bf16.mxu0 %v412
        %1254 = vmatpush1.bf16.msra.mxu0 %v411
        %1255 = vmatprep.subr.bf16.mxu0 0
        %1256 = vmatpush1.bf16.msra.mxu0 0
        %1257 = vmatprep.subr.bf16.mxu0 0
        %1258 = vmatpush1.bf16.msra.mxu0 0
        %1259 = vmatprep.subr.bf16.mxu0 0
        %1260 = vmatpush1.bf16.msra.mxu0 0
        %1261 = vmatprep.subr.bf16.mxu0 0
        %1262 = vmatpush1.bf16.msra.mxu0 0
        %1263 = vmatprep.subr.bf16.mxu0 0
        %1264 = vmatpush1.bf16.msra.mxu0 0
        %1265 = vmatprep.subr.bf16.mxu0 0
        %1266 = vmatpush1.bf16.msra.mxu0 0
        %1267 = vmatprep.subr.bf16.mxu0 0
        %1268 = vmatpush1.bf16.msra.mxu0 0
        %1269 = vmatprep.subr.bf16.mxu0 0
        %1270 = vmatpush1.bf16.msra.mxu0 0
        %1271 = vmatprep.mubr.bf16.mxu0 0
        %1272 = vmatmul.mubr.bf16.gmra.mrb[0].mxu0 %v1197
        %v1273 = vpop.f32.mrb[0].mxu0
        %v1274 = vadd.f32 0.0, %v1273
        %v1275 = vpop.f32.mrb[0].mxu0
        %v1276 = vadd.f32 0.0, %v1275
        %v1277 = vpop.f32.mrb[0].mxu0
        %v1278 = vpop.f32.mrb[0].mxu0
        %1279 = vdwg.mxu0
        %s1280 = scalar_lea.vmem %s237, 96
        %v1281 = vld [vmem:[%s1280] sm:$0xff]
        %v1282 = vld [vmem:[%s1280 + $0x8] sm:$0xff]
        %v1283 = vunpack.c.l.bf16 %v1281
        %v1284 = vunpack.c.h.bf16 %v1281
        %v1285 = vunpack.c.l.bf16 %v1282
        %v1286 = vunpack.c.h.bf16 %v1282
        %v1287 = vadd.f32 %v1283, %v1233
        %v1288 = vadd.f32 %v1284, %v1235
        %v1289 = vadd.f32 %v1285, %v1274
        %v1290 = vadd.f32 %v1286, %v1276
        %v1291 = vxor.u32 %v1287, 2147483648
        %v1292 = vxor.u32 %v1288, 2147483648
        %v1293 = vxor.u32 %v1289, 2147483648
        %v1294 = vmul.f32 %v1291, 1.442695
        %v1295 = vpow.pop %v1294
        %v1296 = vmul.f32 %v1292, 1.442695
        %v1297 = vpow.pop %v1296
        %v1298 = vmul.f32 %v1293, 1.442695
        %v1299 = vpow.pop %v1298
        %v1300 = vadd.f32 %v1295, 1.0
        %v1301 = vadd.f32 %v1297, 1.0
        %v1302 = vadd.f32 %v1299, 1.0
        %v1303 = vrcp.pop %v1300
        %v1304 = vmul.f32 1.0, %v1303
        %v1305 = vrcp.pop %v1301
        %v1306 = vmul.f32 1.0, %v1305
        %v1307 = vrcp.pop %v1302
        %v1308 = vmul.f32 1.0, %v1307
        %v1309 = vtanh.pop %v1290
        %v1310 = vmul.f32 %v1306, %v1196
        %v1311 = vmul.f32 %v1304, %v1309
        %v1312 = vadd.f32 %v1310, %v1311
        %v1313 = vtanh.pop %v1312
        %v1314 = vmul.f32 %v1308, %v1313
        %1315 = vst [vmem:[#allocation2] sm:$0xff] %v1314
        %1316 = vst [vmem:[#allocation3] sm:$0xff] %v1312
        %s1317 = scalar_lea.vmem %s224, 48 [#allocation4]
        %1318 = vst [vmem:[%s1317] sm:$0xff] %v1314
        %s1319 = scalar_lea.vmem %s231, 48 [#allocation6]
        %1320 = vst [vmem:[%s1319] sm:$0xff] %v1312
        %v1321 = vld [vmem:[#allocation2] sm:$0xff]
        %v1322 = vld [vmem:[#allocation3] sm:$0xff]
        %v1323 = vpack.c.bf16 %v1321, %v1321
        %1324 = vmatprep.subr.bf16.mxu0 %v382
        %1325 = vmatpush1.bf16.msra.mxu0 %v381
        %1326 = vmatprep.subr.bf16.mxu0 %v386
        %1327 = vmatpush1.bf16.msra.mxu0 %v385
        %1328 = vmatprep.subr.bf16.mxu0 %v390
        %1329 = vmatpush1.bf16.msra.mxu0 %v389
        %1330 = vmatprep.subr.bf16.mxu0 %v394
        %1331 = vmatpush1.bf16.msra.mxu0 %v393
        %1332 = vmatprep.subr.bf16.mxu0 %v398
        %1333 = vmatpush1.bf16.msra.mxu0 %v397
        %1334 = vmatprep.subr.bf16.mxu0 %v402
        %1335 = vmatpush1.bf16.msra.mxu0 %v401
        %1336 = vmatprep.subr.bf16.mxu0 %v406
        %1337 = vmatpush1.bf16.msra.mxu0 %v405
        %1338 = vmatprep.subr.bf16.mxu0 %v410
        %1339 = vmatpush1.bf16.msra.mxu0 %v409
        %1340 = vmatprep.subr.bf16.mxu0 0
        %1341 = vmatpush1.bf16.msra.mxu0 0
        %1342 = vmatprep.subr.bf16.mxu0 0
        %1343 = vmatpush1.bf16.msra.mxu0 0
        %1344 = vmatprep.subr.bf16.mxu0 0
        %1345 = vmatpush1.bf16.msra.mxu0 0
        %1346 = vmatprep.subr.bf16.mxu0 0
        %1347 = vmatpush1.bf16.msra.mxu0 0
        %1348 = vmatprep.subr.bf16.mxu0 0
        %1349 = vmatpush1.bf16.msra.mxu0 0
        %1350 = vmatprep.subr.bf16.mxu0 0
        %1351 = vmatpush1.bf16.msra.mxu0 0
        %1352 = vmatprep.subr.bf16.mxu0 0
        %1353 = vmatpush1.bf16.msra.mxu0 0
        %1354 = vmatprep.subr.bf16.mxu0 0
        %1355 = vmatpush1.bf16.msra.mxu0 0
        %1356 = vmatprep.mubr.bf16.mxu0 0
        %1357 = vmatmul.mubr.bf16.gmra.mrb[0].mxu0 %v1323
        %v1358 = vpop.f32.mrb[0].mxu0
        %v1359 = vadd.f32 0.0, %v1358
        %v1360 = vpop.f32.mrb[0].mxu0
        %v1361 = vadd.f32 0.0, %v1360
        %v1362 = vpop.f32.mrb[0].mxu0
        %v1363 = vpop.f32.mrb[0].mxu0
        %1364 = vdwg.mxu0
        %1365 = vmatprep.subr.bf16.mxu0 %v384
        %1366 = vmatpush1.bf16.msra.mxu0 %v383
        %1367 = vmatprep.subr.bf16.mxu0 %v388
        %1368 = vmatpush1.bf16.msra.mxu0 %v387
        %1369 = vmatprep.subr.bf16.mxu0 %v392
        %1370 = vmatpush1.bf16.msra.mxu0 %v391
        %1371 = vmatprep.subr.bf16.mxu0 %v396
        %1372 = vmatpush1.bf16.msra.mxu0 %v395
        %1373 = vmatprep.subr.bf16.mxu0 %v400
        %1374 = vmatpush1.bf16.msra.mxu0 %v399
        %1375 = vmatprep.subr.bf16.mxu0 %v404
        %1376 = vmatpush1.bf16.msra.mxu0 %v403
        %1377 = vmatprep.subr.bf16.mxu0 %v408
        %1378 = vmatpush1.bf16.msra.mxu0 %v407
        %1379 = vmatprep.subr.bf16.mxu0 %v412
        %1380 = vmatpush1.bf16.msra.mxu0 %v411
        %1381 = vmatprep.subr.bf16.mxu0 0
        %1382 = vmatpush1.bf16.msra.mxu0 0
        %1383 = vmatprep.subr.bf16.mxu0 0
        %1384 = vmatpush1.bf16.msra.mxu0 0
        %1385 = vmatprep.subr.bf16.mxu0 0
        %1386 = vmatpush1.bf16.msra.mxu0 0
        %1387 = vmatprep.subr.bf16.mxu0 0
        %1388 = vmatpush1.bf16.msra.mxu0 0
        %1389 = vmatprep.subr.bf16.mxu0 0
        %1390 = vmatpush1.bf16.msra.mxu0 0
        %1391 = vmatprep.subr.bf16.mxu0 0
        %1392 = vmatpush1.bf16.msra.mxu0 0
        %1393 = vmatprep.subr.bf16.mxu0 0
        %1394 = vmatpush1.bf16.msra.mxu0 0
        %1395 = vmatprep.subr.bf16.mxu0 0
        %1396 = vmatpush1.bf16.msra.mxu0 0
        %1397 = vmatprep.mubr.bf16.mxu0 0
        %1398 = vmatmul.mubr.bf16.gmra.mrb[0].mxu0 %v1323
        %v1399 = vpop.f32.mrb[0].mxu0
        %v1400 = vadd.f32 0.0, %v1399
        %v1401 = vpop.f32.mrb[0].mxu0
        %v1402 = vadd.f32 0.0, %v1401
        %v1403 = vpop.f32.mrb[0].mxu0
        %v1404 = vpop.f32.mrb[0].mxu0
        %1405 = vdwg.mxu0
        %s1406 = scalar_lea.vmem %s237, 112
        %v1407 = vld [vmem:[%s1406] sm:$0xff]
        %v1408 = vld [vmem:[%s1406 + $0x8] sm:$0xff]
        %v1409 = vunpack.c.l.bf16 %v1407
        %v1410 = vunpack.c.h.bf16 %v1407
        %v1411 = vunpack.c.l.bf16 %v1408
        %v1412 = vunpack.c.h.bf16 %v1408
        %v1413 = vadd.f32 %v1409, %v1359
        %v1414 = vadd.f32 %v1410, %v1361
        %v1415 = vadd.f32 %v1411, %v1400
        %v1416 = vadd.f32 %v1412, %v1402
        %v1417 = vxor.u32 %v1413, 2147483648
        %v1418 = vxor.u32 %v1414, 2147483648
        %v1419 = vxor.u32 %v1415, 2147483648
        %v1420 = vmul.f32 %v1417, 1.442695
        %v1421 = vpow.pop %v1420
        %v1422 = vmul.f32 %v1418, 1.442695
        %v1423 = vpow.pop %v1422
        %v1424 = vmul.f32 %v1419, 1.442695
        %v1425 = vpow.pop %v1424
        %v1426 = vadd.f32 %v1421, 1.0
        %v1427 = vadd.f32 %v1423, 1.0
        %v1428 = vadd.f32 %v1425, 1.0
        %v1429 = vrcp.pop %v1426
        %v1430 = vmul.f32 1.0, %v1429
        %v1431 = vrcp.pop %v1427
        %v1432 = vmul.f32 1.0, %v1431
        %v1433 = vrcp.pop %v1428
        %v1434 = vmul.f32 1.0, %v1433
        %v1435 = vtanh.pop %v1416
        %v1436 = vmul.f32 %v1432, %v1322
        %v1437 = vmul.f32 %v1430, %v1435
        %v1438 = vadd.f32 %v1436, %v1437
        %v1439 = vtanh.pop %v1438
        %v1440 = vmul.f32 %v1434, %v1439
        %1441 = vst [vmem:[#allocation2] sm:$0xff] %v1440
        %1442 = vst [vmem:[#allocation3] sm:$0xff] %v1438
        %s1443 = scalar_lea.vmem %s224, 56 [#allocation4]
        %1444 = vst [vmem:[%s1443] sm:$0xff] %v1440
        %s1445 = scalar_lea.vmem %s231, 56 [#allocation6]
        %1446 = vst [vmem:[%s1445] sm:$0xff] %v1438
        %s1447 = sand.u32 %s120, 1
        %s1448 = scalar_lea.sflag [#allocation5], %s1447
        %s1449 = sand.u32 %s120, 1
        %s1450 = smul.addr %s1449, 64
        %s1451 = scalar_lea.vmem [#allocation4], %s1450
        %s1452 = sand.u32 %s146, 1
        %s1453 = scalar_lea.sflag [#allocation7], %s1452
        %s1454 = sand.u32 %s146, 1
        %s1455 = smul.addr %s1454, 64
        %s1456 = scalar_lea.vmem [#allocation6], %s1455
        // Predicated region
        $region41: #{lstm_sequence_forward.1} parent=35 // pred_check
          %p1457 = pneg %p130
        $region42: #{lstm_sequence_forward.1} parent=35 // pred_check_branch
          %1459 = sbr.rel (%p1457) target = $region44
        $region43: #{lstm_sequence_forward.1} parent=35 // pred_region
          %s1460 = smul.u32 8, %s23
          %s1462 = ssub.s32 1024, 1024
          %1463 = vsyncadd %s1448, %s1462
          %s1464 = smul.addr %s1460, 128
          %s1465 = scalar_lea.hbm %s4, %s1464
          %s1466 = sshll.u32 %s1451, 4
          %s1467 = int_to_ptr.vmem [resolvable:$true] %s1466
          %1472 = dma.vmem_to_hbm [thread:$0]  %s1467, 1024, %s1465, %s1448, 128, 128, 8
        $region44: #{lstm_sequence_forward.1} parent=35 // pred_fallthru
          _
        // Predicated region
        $region45: #{lstm_sequence_forward.1} parent=35 // pred_check
          %p1473 = pneg %p156
        $region46: #{lstm_sequence_forward.1} parent=35 // pred_check_branch
          %1475 = sbr.rel (%p1473) target = $region48
        $region47: #{lstm_sequence_forward.1} parent=35 // pred_region
          %s1476 = smul.u32 8, %s23
          %s1478 = ssub.s32 1024, 1024
          %1479 = vsyncadd %s1453, %s1478
          %s1480 = smul.addr %s1476, 128
          %s1481 = scalar_lea.hbm %s5, %s1480
          %s1482 = sshll.u32 %s1456, 4
          %s1483 = int_to_ptr.vmem [resolvable:$true] %s1482
          %1488 = dma.vmem_to_hbm [thread:$0]  %s1483, 1024, %s1481, %s1453, 128, 128, 8
        $region48: #{lstm_sequence_forward.1} parent=35 // pred_fallthru
          _
      $region36: #{lstm_sequence_forward.1} parent=5 // pred_fallthru
        _
      %p1489 = scmp.le.s32.totalorder 2, %s18
      // Predicated region
      $region49: #{lstm_sequence_forward.1} parent=5 // pred_check
        %p1490 = pneg %p1489
      $region50: #{lstm_sequence_forward.1} parent=5 // pred_check_branch
        %1492 = sbr.rel (%p1490) target = $region52
      $region51: #{lstm_sequence_forward.1} parent=5 // pred_region
        %s1493 = ssub.s32 %s18, 2
        // Predicated region
        $region53: #{lstm_sequence_forward.1} parent=51 // pred_check
          %p1494 = pneg %p136
        $region54: #{lstm_sequence_forward.1} parent=51 // pred_check_branch
          %1496 = sbr.rel (%p1494) target = $region56
        $region55: #{lstm_sequence_forward.1} parent=51 // pred_region
          %s1497 = sand.u32 %s121, 1
          %s1498 = scalar_lea.sflag [#allocation5], %s1497
          %s1499 = sand.u32 %s121, 1
          %s1500 = smul.addr %s1499, 64
          %s1501 = scalar_lea.vmem [#allocation4], %s1500
          %1502 = dma.done %s1498, 1024
        $region56: #{lstm_sequence_forward.1} parent=51 // pred_fallthru
          _
        // Predicated region
        $region57: #{lstm_sequence_forward.1} parent=51 // pred_check
          %p1503 = pneg %p162
        $region58: #{lstm_sequence_forward.1} parent=51 // pred_check_branch
          %1505 = sbr.rel (%p1503) target = $region60
        $region59: #{lstm_sequence_forward.1} parent=51 // pred_region
          %s1506 = sand.u32 %s147, 1
          %s1507 = scalar_lea.sflag [#allocation7], %s1506
          %s1508 = sand.u32 %s147, 1
          %s1509 = smul.addr %s1508, 64
          %s1510 = scalar_lea.vmem [#allocation6], %s1509
          %1511 = dma.done %s1507, 1024
        $region60: #{lstm_sequence_forward.1} parent=51 // pred_fallthru
          _
      $region52: #{lstm_sequence_forward.1} parent=5 // pred_fallthru
        _
    $region6: #{lstm_sequence_forward.1} parent=1 // loop_footer
      %s22 = sadd.s32 1, %s18
    $region7: #{lstm_sequence_forward.1} parent=1 // loop_footer_branch
      %17 = sbr.rel target = $region3
    $region8: #{lstm_sequence_forward.1} parent=1 // loop_exit
      _
    %1512 = vsyncpa [#allocation5], 1
    %s1513 = scalar_lea.sflag [#allocation5], 1
    %1514 = vsyncpa %s1513, 1
    %1515 = vsyncpa [#allocation7], 1
    %s1516 = scalar_lea.sflag [#allocation7], 1
    %1517 = vsyncpa %s1516, 1

</llo_original>
